<compile_context>
chip_gen: v7x
topology: tpu7x:2x2x1
jax: 0.10.0
libtpu: 0.0.40
codegen_flags: <defaults>
</compile_context>

<pallas_src>
import math

import jax
import jax.numpy as jnp
from jax.experimental import pallas as pl
from jax.experimental.pallas import tpu as pltpu

SMALL_NUMBER = 1e-8

# ----------------------------- configuration ------------------------------
HIDDEN = 32              # D
EDGE_TYPE_COUNT = 2
BACKWARD_EDGES = True
NUM_ETYPES = EDGE_TYPE_COUNT * 2 if BACKWARD_EDGES else EDGE_TYPE_COUNT  # T
GNN_LAYERS = 2
MSG_SHARE = 1
UPD_SHARE = 1
N_NODES = 64
N_EDGES = 40
N_GRAPHS = 2             # graphs batched per pallas_call
LANES = 128


# --------------------------- fused Pallas kernel ----------------------------
def ggnn_fused_kernel(ns_ref, s_ref, gb_ref, wm_ref, wg_ref, out_ref):
    """Fused GGNN forward for one graph: GNN_LAYERS x (message + mean-agg + GRU).

    ns_ref : (1, N, D)        initial node states for this graph
    s_ref  : (1, N, T*N)      stacked scatter matrices, 1/bincount pre-folded
    gb_ref : (1, L, N, 4D)    per-layer GRU pre-activation bias (bm-through-S,
                              SMALL_NUMBER and GRU biases all folded in)
    wm_ref : (Lm, D, T*D)     packed message weights (W^T), no bias
    wg_ref : (Lu, 2D, 4D)     packed GRU weights, rows=[x|h], cols=[r|z|gi_n|gh_n]
    out_ref: (1, N*D/128,128) final node states, lane-dense packed
    """
    D = HIDDEN
    T = NUM_ETYPES
    N = ns_ref.shape[1]

    h = ns_ref[0]                                        # (N, D) carried in VMEM
    s_cat = s_ref[0]                                     # (N, T*N)

    for layer in range(GNN_LAYERS):                      # fully unrolled (L=2)
        mi = layer // MSG_SHARE
        ui = layer // UPD_SHARE

        # --- GGNNMessageLayer: one lane-dense transform for all edge types
        prop = jnp.dot(h, wm_ref[mi],
                       preferred_element_type=jnp.float32)           # (N, T*D)
        # rearrange (N, T*D) -> (T*N, D): per-type lane slices stacked on rows
        prop_r = jnp.concatenate(
            [prop[:, t * D:(t + 1) * D] for t in range(T)], axis=0)  # (T*N, D)
        # single stacked scatter-mean matmul, K = T*N = 256
        msg = jnp.dot(s_cat, prop_r,
                      preferred_element_type=jnp.float32)            # (N, D)

        # --- GGNNUpdateLayer: GRUCell, one fused [msg|h] @ Wg matmul
        xh = jnp.concatenate([msg, h], axis=1)                       # (N, 2D)
        g = (jnp.dot(xh, wg_ref[ui], preferred_element_type=jnp.float32)
             + gb_ref[0, layer])                                     # (N, 4D)
        rz = jax.nn.sigmoid(g[:, :2 * D])                            # 64-lane EUP
        r = rz[:, :D]
        z = rz[:, D:]
        n = jnp.tanh(g[:, 2 * D:3 * D] + r * g[:, 3 * D:])
        h = n + z * (h - n)                                          # (1-z)n + zh

    # lane-dense output packing: (N, D) -> (N*D/128, 128) unmasked store
    blocks = LANES // D
    rows = N // blocks
    out_ref[0] = jnp.concatenate(
        [h[i * rows:(i + 1) * rows] for i in range(blocks)], axis=1)


# --------------------------- kernel wrapper ---------------------------------
def ggnn_forward_fused(node_states_b, s_cat_b, gbias_b, packed):
    """Batched fused forward.  node_states_b (B,N,D), s_cat_b (B,N,T*N),
    gbias_b (B,L,N,4D).  Returns (B,N,D)."""
    B, N, D = node_states_b.shape
    T = NUM_ETYPES
    L = GNN_LAYERS
    rows = (N * D) // LANES
    wm, wg = packed["wm"], packed["wg"]

    out_packed = pl.pallas_call(
        ggnn_fused_kernel,
        out_shape=jax.ShapeDtypeStruct((B, rows, LANES), node_states_b.dtype),
        grid_spec=pltpu.PrefetchScalarGridSpec(
            num_scalar_prefetch=0,
            grid=(B,),
            in_specs=[
                pl.BlockSpec((1, N, D), lambda b: (b, 0, 0)),
                pl.BlockSpec((1, N, T * N), lambda b: (b, 0, 0)),
                pl.BlockSpec((1, L, N, 4 * D), lambda b: (b, 0, 0, 0)),
                pl.BlockSpec(wm.shape, lambda b: (0, 0, 0)),   # shared weights
                pl.BlockSpec(wg.shape, lambda b: (0, 0, 0)),   # shared weights
            ],
            out_specs=pl.BlockSpec((1, rows, LANES), lambda b: (b, 0, 0)),
        ),
        compiler_params=pltpu.CompilerParams(
            dimension_semantics=("parallel",)),
    )(node_states_b, s_cat_b, gbias_b, wm, wg)

    # undo lane-dense packing: (B, rows, 128) -> (B, N, D)
    blocks = LANES // D
    return jnp.concatenate(
        [out_packed[:, :, i * D:(i + 1) * D] for i in range(blocks)], axis=1)


# --------------------------- parameter init ---------------------------------
def xavier_uniform(key, out_features, in_features, gain=1.0):
    bound = gain * math.sqrt(6.0 / (in_features + out_features))
    return jax.random.uniform(key, (out_features, in_features),
                              jnp.float32, -bound, bound)


def init_params(key):
    """Raw parameters, matching the PyTorch module's initializers."""
    D, T = HIDDEN, NUM_ETYPES
    msg_layers = GNN_LAYERS // MSG_SHARE
    upd_layers = GNN_LAYERS // UPD_SHARE
    params = {"message": [], "update": []}
    for _ in range(msg_layers):
        key, k1 = jax.random.split(key)
        W = xavier_uniform(k1, D * T, D)              # LinearNet.test
        b = jnp.zeros((D * T,), jnp.float32)          # LinearNet.bias (zeros)
        params["message"].append((W, b))
    stdv = 1.0 / math.sqrt(D)
    for _ in range(upd_layers):
        key, k1, k2, k3, k4 = jax.random.split(key, 5)
        w_ih = jax.random.uniform(k1, (3 * D, D), jnp.float32, -stdv, stdv)
        w_hh = jax.random.uniform(k2, (3 * D, D), jnp.float32, -stdv, stdv)
        b_ih = jax.random.uniform(k3, (3 * D,), jnp.float32, -stdv, stdv)
        b_hh = jax.random.uniform(k4, (3 * D,), jnp.float32, -stdv, stdv)
        params["update"].append((w_ih, w_hh, b_ih, b_hh))
    return params


def pack_params(params):
    """One-time weight packing (hoisted out of the per-forward path)."""
    D = HIDDEN
    # message: prop = ns @ W^T  ->  pass W^T (D, T*D); bias bm kept separately,
    # it is folded through S into the per-graph GRU bias in prepare_graph().
    wm = jnp.stack([W.T for W, _ in params["message"]])           # (Lm, D, T*D)
    bm = jnp.stack([b for _, b in params["message"]])             # (Lm, T*D)
    # GRU: single (2D, 4D) weight, rows = [x-path | h-path],
    # cols = [ r | z | gi_n | gh_n ]
    wgs, bgs = [], []
    for w_ih, w_hh, b_ih, b_hh in params["update"]:
        wir, wiz, win = w_ih[:D], w_ih[D:2 * D], w_ih[2 * D:]
        whr, whz, whn = w_hh[:D], w_hh[D:2 * D], w_hh[2 * D:]
        zero = jnp.zeros((D, D), jnp.float32)
        wg_x = jnp.concatenate([wir.T, wiz.T, win.T, zero], axis=1)   # (D, 4D)
        wg_h = jnp.concatenate([whr.T, whz.T, zero, whn.T], axis=1)   # (D, 4D)
        wgs.append(jnp.concatenate([wg_x, wg_h], axis=0))             # (2D, 4D)
        bgs.append(jnp.concatenate([b_ih[:D] + b_hh[:D],
                                    b_ih[D:2 * D] + b_hh[D:2 * D],
                                    b_ih[2 * D:], b_hh[2 * D:]]))     # (4D,)
    return dict(wm=wm, bm=bm, wg=jnp.stack(wgs), bg=jnp.stack(bgs))


# --------------------------- per-graph precompute (hoisted) ------------------
def prepare_graph(edge_lists, n_nodes, packed):
    """Per-graph precompute, done ONCE per graph outside the forward hot path.

    Returns:
      s_cat : (N, T*N)   S_cat[:, t*N+src] = (#type-t edges src->tgt)/bincount[tgt]
      gbias : (L, N, 4D) per-layer GRU pre-activation bias with the message bias
                         (bm routed through S), SMALL_NUMBER and the GRU biases
                         folded through the x-path rows of Wg.
    """
    D, T = HIDDEN, NUM_ETYPES
    # backward_edges: append flipped edge lists (torch .flip([1]))
    all_edges = list(edge_lists) + [e[:, ::-1] for e in edge_lists]
    s = jnp.stack([
        jnp.zeros((n_nodes, n_nodes), jnp.float32).at[e[:, 1], e[:, 0]].add(1.0)
        for e in all_edges
    ])                                                   # (T, N, N)
    cnt = jnp.sum(s, axis=(0, 2))                        # bincount per target
    inv_div = 1.0 / jnp.where(cnt == 0.0, 1.0, cnt)      # msg_mean_aggregation
    s_scaled = s * inv_div[None, :, None]                # (T, N, N)
    s_cat = jnp.concatenate(list(s_scaled), axis=1)      # (N, T*N)

    rowsum = jnp.sum(s_scaled, axis=2)                   # (T, N)
    gbias = []
    for layer in range(GNN_LAYERS):
        mi = layer // MSG_SHARE
        ui = layer // UPD_SHARE
        bm_td = packed["bm"][mi].reshape(T, D)           # (T, D)
        bm_agg = rowsum.T @ bm_td                        # (N, D): bm through S
        wg_x = packed["wg"][ui][:D, :]                   # (D, 4D) x-path rows
        gbias.append(packed["bg"][ui][None, :]
                     + (bm_agg + SMALL_NUMBER) @ wg_x)   # (N, 4D)
    return s_cat, jnp.stack(gbias)                       # (N,T*N), (L,N,4D)


# --------------------------- encoder forward ---------------------------------
def ggnn_encoder_forward(node_states_b, prepared_b, packed):
    """Mirrors GGNNEncoder.forward (unroll_strategy='none', eval mode) for a
    batch of B independent graphs in one pallas_call."""
    old_node_states = node_states_b                      # .clone()
    s_cat_b, gbias_b = prepared_b
    new_states = ggnn_forward_fused(node_states_b, s_cat_b, gbias_b, packed)
    return new_states, old_node_states


# --------------------------- plain-JAX reference ------------------------------
def _ref_forward(edge_lists, node_states, params):
    old = node_states
    all_edges = list(edge_lists) + [e[:, ::-1] for e in edge_lists]
    N, D = node_states.shape
    for i in range(GNN_LAYERS):
        W, b = params["message"][i // MSG_SHARE]
        w_ih, w_hh, b_ih, b_hh = params["update"][i // UPD_SHARE]
        prop = node_states @ W.T + b
        chunks = jnp.split(prop, NUM_ETYPES, axis=1)
        msgs = jnp.zeros_like(node_states)
        binc = jnp.zeros((N,), jnp.float32)
        for t, e in enumerate(all_edges):
            src, tgt = e[:, 0], e[:, 1]
            msgs = msgs.at[tgt].add(chunks[t][src])
            binc = binc.at[tgt].add(1.0)
        div = jnp.where(binc == 0, 1.0, binc)
        messages = msgs / div[:, None] + SMALL_NUMBER
        gi = messages @ w_ih.T + b_ih
        gh = node_states @ w_hh.T + b_hh
        r = jax.nn.sigmoid(gi[:, :D] + gh[:, :D])
        z = jax.nn.sigmoid(gi[:, D:2 * D] + gh[:, D:2 * D])
        n = jnp.tanh(gi[:, 2 * D:] + r * gh[:, 2 * D:])
        node_states = (1.0 - z) * n + z * node_states
    return node_states, old


# ------------------------------ main ------------------------------------------
if __name__ == "__main__":
    key = jax.random.PRNGKey(0)
    params_key, key = jax.random.split(key)
    params = init_params(params_key)
    packed = pack_params(params)                 # one-time packing (hoisted)

    node_states_list, edge_lists_list, prepared_list = [], [], []
    for g in range(N_GRAPHS):
        key, k_ns, k_e0, k_e1 = jax.random.split(key, 4)
        ns = jax.random.normal(k_ns, (N_NODES, HIDDEN), jnp.float32)
        el = [
            jax.random.randint(k_e0, (N_EDGES, 2), 0, N_NODES, jnp.int32),
            jax.random.randint(k_e1, (N_EDGES, 2), 0, N_NODES, jnp.int32),
        ]
        node_states_list.append(ns)
        edge_lists_list.append(el)
        prepared_list.append(prepare_graph(el, N_NODES, packed))  # per-graph, hoisted

    node_states_b = jnp.stack(node_states_list)                       # (B, N, D)
    s_cat_b = jnp.stack([p[0] for p in prepared_list])                # (B, N, T*N)
    gbias_b = jnp.stack([p[1] for p in prepared_list])                # (B, L, N, 4D)

    out_states, old_states = ggnn_encoder_forward(
        node_states_b, (s_cat_b, gbias_b), packed)
    out_states = jax.block_until_ready(out_states)
    old_states = jax.block_until_ready(old_states)
    assert out_states.shape == (N_GRAPHS, N_NODES, HIDDEN)

    for g in range(N_GRAPHS):
        ref_out, ref_old = _ref_forward(edge_lists_list[g],
                                        node_states_list[g], params)
        assert jnp.allclose(old_states[g], ref_old)
        assert jnp.allclose(out_states[g], ref_out, atol=5e-5, rtol=5e-5), (
            g, float(jnp.max(jnp.abs(out_states[g] - ref_out))))

    print("KERNEL_OK")
</pallas_src>

<mosaic_0001>
module attributes {stable_mosaic.version = 11 : i64} {
  func.func @ggnn_fused_kernel(%arg0: i32, %arg1: memref<1x64x32xf32, #tpu.memory_space<vmem>>, %arg2: memref<1x64x256xf32, #tpu.memory_space<vmem>>, %arg3: memref<1x2x64x128xf32, #tpu.memory_space<vmem>>, %arg4: memref<2x32x128xf32, #tpu.memory_space<vmem>>, %arg5: memref<2x64x128xf32, #tpu.memory_space<vmem>>, %arg6: memref<1x16x128xf32, #tpu.memory_space<vmem>>) attributes {dimension_semantics = [#tpu.dimension_semantics<parallel>], iteration_bounds = array<i64: 2>, scalar_prefetch = 0 : i64, scratch_operands = 0 : i64, tpu.core_type = #tpu.core_type<tc>, window_params = [{transform_indices = @transform_0, window_bounds = array<i64: 1, 64, 32>}, {transform_indices = @transform_1, window_bounds = array<i64: 1, 64, 256>}, {transform_indices = @transform_2, window_bounds = array<i64: 1, 2, 64, 128>}, {pipeline_mode = #tpu.pipeline_mode<synchronous>, transform_indices = @transform_3, window_bounds = array<i64: 2, 32, 128>}, {pipeline_mode = #tpu.pipeline_mode<synchronous>, transform_indices = @transform_4, window_bounds = array<i64: 2, 64, 128>}, {transform_indices = @transform_5, window_bounds = array<i64: 1, 16, 128>}]} {
    %c0 = arith.constant 0 : index
    %c0_0 = arith.constant 0 : index
    %c0_1 = arith.constant 0 : index
    %0 = vector.load %arg1[%c0, %c0_0, %c0_1] : memref<1x64x32xf32, #tpu.memory_space<vmem>>, vector<1x64x32xf32>
    %1 = vector.shape_cast %0 : vector<1x64x32xf32> to vector<64x32xf32>
    %c0_2 = arith.constant 0 : index
    %c0_3 = arith.constant 0 : index
    %c0_4 = arith.constant 0 : index
    %2 = vector.load %arg2[%c0_2, %c0_3, %c0_4] : memref<1x64x256xf32, #tpu.memory_space<vmem>>, vector<1x64x256xf32>
    %3 = vector.shape_cast %2 : vector<1x64x256xf32> to vector<64x256xf32>
    %c0_5 = arith.constant 0 : index
    %c0_6 = arith.constant 0 : index
    %c0_7 = arith.constant 0 : index
    %4 = vector.load %arg4[%c0_5, %c0_6, %c0_7] : memref<2x32x128xf32, #tpu.memory_space<vmem>>, vector<1x32x128xf32>
    %5 = vector.shape_cast %4 : vector<1x32x128xf32> to vector<32x128xf32>
    %cst = arith.constant dense<0.000000e+00> : vector<64x128xf32>
    %6 = tpu.matmul %1, %5, %cst {dimension_numbers = #tpu.dot_dimension_numbers<[1], [0], [0], [1], [0, 0, 1, 1], [], []>} : vector<64x32xf32>, vector<32x128xf32>, vector<64x128xf32> -> vector<64x128xf32>
    %7 = vector.extract_strided_slice %6 {offsets = [0, 0], sizes = [64, 32], strides = [1, 1]} : vector<64x128xf32> to vector<64x32xf32>
    %8 = vector.extract_strided_slice %6 {offsets = [0, 32], sizes = [64, 32], strides = [1, 1]} : vector<64x128xf32> to vector<64x32xf32>
    %9 = vector.extract_strided_slice %6 {offsets = [0, 64], sizes = [64, 32], strides = [1, 1]} : vector<64x128xf32> to vector<64x32xf32>
    %10 = vector.extract_strided_slice %6 {offsets = [0, 96], sizes = [64, 32], strides = [1, 1]} : vector<64x128xf32> to vector<64x32xf32>
    %11 = tpu.concatenate %7, %8, %9, %10 in 0 : vector<64x32xf32>, vector<64x32xf32>, vector<64x32xf32>, vector<64x32xf32> -> vector<256x32xf32>
    %cst_8 = arith.constant dense<0.000000e+00> : vector<64x32xf32>
    %12 = tpu.matmul %3, %11, %cst_8 {dimension_numbers = #tpu.dot_dimension_numbers<[1], [0], [0], [1], [0, 0, 1, 1], [], []>} : vector<64x256xf32>, vector<256x32xf32>, vector<64x32xf32> -> vector<64x32xf32>
    %13 = tpu.concatenate %12, %1 in 1 : vector<64x32xf32>, vector<64x32xf32> -> vector<64x64xf32>
    %c0_9 = arith.constant 0 : index
    %c0_10 = arith.constant 0 : index
    %c0_11 = arith.constant 0 : index
    %14 = vector.load %arg5[%c0_9, %c0_10, %c0_11] : memref<2x64x128xf32, #tpu.memory_space<vmem>>, vector<1x64x128xf32>
    %15 = vector.shape_cast %14 : vector<1x64x128xf32> to vector<64x128xf32>
    %cst_12 = arith.constant dense<0.000000e+00> : vector<64x128xf32>
    %16 = tpu.matmul %13, %15, %cst_12 {dimension_numbers = #tpu.dot_dimension_numbers<[1], [0], [0], [1], [0, 0, 1, 1], [], []>} : vector<64x64xf32>, vector<64x128xf32>, vector<64x128xf32> -> vector<64x128xf32>
    %c0_13 = arith.constant 0 : index
    %c0_14 = arith.constant 0 : index
    %c0_15 = arith.constant 0 : index
    %c0_16 = arith.constant 0 : index
    %17 = vector.load %arg3[%c0_13, %c0_14, %c0_15, %c0_16] : memref<1x2x64x128xf32, #tpu.memory_space<vmem>>, vector<1x1x64x128xf32>
    %18 = vector.shape_cast %17 : vector<1x1x64x128xf32> to vector<64x128xf32>
    %19 = arith.addf %16, %18 : vector<64x128xf32>
    %20 = vector.extract_strided_slice %19 {offsets = [0, 0], sizes = [64, 64], strides = [1, 1]} : vector<64x128xf32> to vector<64x64xf32>
    %21 = arith.negf %20 : vector<64x64xf32>
    %22 = math.exp %21 : vector<64x64xf32>
    %cst_17 = arith.constant 1.000000e+00 : f32
    %23 = vector.broadcast %cst_17 : f32 to vector<64x64xf32>
    %24 = arith.addf %23, %22 : vector<64x64xf32>
    %25 = arith.divf %23, %24 : vector<64x64xf32>
    %26 = vector.extract_strided_slice %25 {offsets = [0, 0], sizes = [64, 32], strides = [1, 1]} : vector<64x64xf32> to vector<64x32xf32>
    %27 = vector.extract_strided_slice %25 {offsets = [0, 32], sizes = [64, 32], strides = [1, 1]} : vector<64x64xf32> to vector<64x32xf32>
    %28 = vector.extract_strided_slice %19 {offsets = [0, 64], sizes = [64, 32], strides = [1, 1]} : vector<64x128xf32> to vector<64x32xf32>
    %29 = vector.extract_strided_slice %19 {offsets = [0, 96], sizes = [64, 32], strides = [1, 1]} : vector<64x128xf32> to vector<64x32xf32>
    %30 = arith.mulf %26, %29 : vector<64x32xf32>
    %31 = arith.addf %28, %30 : vector<64x32xf32>
    %32 = math.tanh %31 : vector<64x32xf32>
    %33 = arith.subf %1, %32 : vector<64x32xf32>
    %34 = arith.mulf %27, %33 : vector<64x32xf32>
    %35 = arith.addf %32, %34 : vector<64x32xf32>
    %c1 = arith.constant 1 : index
    %c0_18 = arith.constant 0 : index
    %c0_19 = arith.constant 0 : index
    %36 = vector.load %arg4[%c1, %c0_18, %c0_19] : memref<2x32x128xf32, #tpu.memory_space<vmem>>, vector<1x32x128xf32>
    %37 = vector.shape_cast %36 : vector<1x32x128xf32> to vector<32x128xf32>
    %cst_20 = arith.constant dense<0.000000e+00> : vector<64x128xf32>
    %38 = tpu.matmul %35, %37, %cst_20 {dimension_numbers = #tpu.dot_dimension_numbers<[1], [0], [0], [1], [0, 0, 1, 1], [], []>} : vector<64x32xf32>, vector<32x128xf32>, vector<64x128xf32> -> vector<64x128xf32>
    %39 = vector.extract_strided_slice %38 {offsets = [0, 0], sizes = [64, 32], strides = [1, 1]} : vector<64x128xf32> to vector<64x32xf32>
    %40 = vector.extract_strided_slice %38 {offsets = [0, 32], sizes = [64, 32], strides = [1, 1]} : vector<64x128xf32> to vector<64x32xf32>
    %41 = vector.extract_strided_slice %38 {offsets = [0, 64], sizes = [64, 32], strides = [1, 1]} : vector<64x128xf32> to vector<64x32xf32>
    %42 = vector.extract_strided_slice %38 {offsets = [0, 96], sizes = [64, 32], strides = [1, 1]} : vector<64x128xf32> to vector<64x32xf32>
    %43 = tpu.concatenate %39, %40, %41, %42 in 0 : vector<64x32xf32>, vector<64x32xf32>, vector<64x32xf32>, vector<64x32xf32> -> vector<256x32xf32>
    %cst_21 = arith.constant dense<0.000000e+00> : vector<64x32xf32>
    %44 = tpu.matmul %3, %43, %cst_21 {dimension_numbers = #tpu.dot_dimension_numbers<[1], [0], [0], [1], [0, 0, 1, 1], [], []>} : vector<64x256xf32>, vector<256x32xf32>, vector<64x32xf32> -> vector<64x32xf32>
    %45 = tpu.concatenate %44, %35 in 1 : vector<64x32xf32>, vector<64x32xf32> -> vector<64x64xf32>
    %c1_22 = arith.constant 1 : index
    %c0_23 = arith.constant 0 : index
    %c0_24 = arith.constant 0 : index
    %46 = vector.load %arg5[%c1_22, %c0_23, %c0_24] : memref<2x64x128xf32, #tpu.memory_space<vmem>>, vector<1x64x128xf32>
    %47 = vector.shape_cast %46 : vector<1x64x128xf32> to vector<64x128xf32>
    %cst_25 = arith.constant dense<0.000000e+00> : vector<64x128xf32>
    %48 = tpu.matmul %45, %47, %cst_25 {dimension_numbers = #tpu.dot_dimension_numbers<[1], [0], [0], [1], [0, 0, 1, 1], [], []>} : vector<64x64xf32>, vector<64x128xf32>, vector<64x128xf32> -> vector<64x128xf32>
    %c0_26 = arith.constant 0 : index
    %c1_27 = arith.constant 1 : index
    %c0_28 = arith.constant 0 : index
    %c0_29 = arith.constant 0 : index
    %49 = vector.load %arg3[%c0_26, %c1_27, %c0_28, %c0_29] : memref<1x2x64x128xf32, #tpu.memory_space<vmem>>, vector<1x1x64x128xf32>
    %50 = vector.shape_cast %49 : vector<1x1x64x128xf32> to vector<64x128xf32>
    %51 = arith.addf %48, %50 : vector<64x128xf32>
    %52 = vector.extract_strided_slice %51 {offsets = [0, 0], sizes = [64, 64], strides = [1, 1]} : vector<64x128xf32> to vector<64x64xf32>
    %53 = arith.negf %52 : vector<64x64xf32>
    %54 = math.exp %53 : vector<64x64xf32>
    %cst_30 = arith.constant 1.000000e+00 : f32
    %55 = vector.broadcast %cst_30 : f32 to vector<64x64xf32>
    %56 = arith.addf %55, %54 : vector<64x64xf32>
    %57 = arith.divf %55, %56 : vector<64x64xf32>
    %58 = vector.extract_strided_slice %57 {offsets = [0, 0], sizes = [64, 32], strides = [1, 1]} : vector<64x64xf32> to vector<64x32xf32>
    %59 = vector.extract_strided_slice %57 {offsets = [0, 32], sizes = [64, 32], strides = [1, 1]} : vector<64x64xf32> to vector<64x32xf32>
    %60 = vector.extract_strided_slice %51 {offsets = [0, 64], sizes = [64, 32], strides = [1, 1]} : vector<64x128xf32> to vector<64x32xf32>
    %61 = vector.extract_strided_slice %51 {offsets = [0, 96], sizes = [64, 32], strides = [1, 1]} : vector<64x128xf32> to vector<64x32xf32>
    %62 = arith.mulf %58, %61 : vector<64x32xf32>
    %63 = arith.addf %60, %62 : vector<64x32xf32>
    %64 = math.tanh %63 : vector<64x32xf32>
    %65 = arith.subf %35, %64 : vector<64x32xf32>
    %66 = arith.mulf %59, %65 : vector<64x32xf32>
    %67 = arith.addf %64, %66 : vector<64x32xf32>
    %68 = vector.extract_strided_slice %67 {offsets = [0, 0], sizes = [16, 32], strides = [1, 1]} : vector<64x32xf32> to vector<16x32xf32>
    %69 = vector.extract_strided_slice %67 {offsets = [16, 0], sizes = [16, 32], strides = [1, 1]} : vector<64x32xf32> to vector<16x32xf32>
    %70 = vector.extract_strided_slice %67 {offsets = [32, 0], sizes = [16, 32], strides = [1, 1]} : vector<64x32xf32> to vector<16x32xf32>
    %71 = vector.extract_strided_slice %67 {offsets = [48, 0], sizes = [16, 32], strides = [1, 1]} : vector<64x32xf32> to vector<16x32xf32>
    %72 = tpu.concatenate %68, %69, %70, %71 in 1 : vector<16x32xf32>, vector<16x32xf32>, vector<16x32xf32>, vector<16x32xf32> -> vector<16x128xf32>
    %c0_31 = arith.constant 0 : index
    %c0_32 = arith.constant 0 : index
    %c0_33 = arith.constant 0 : index
    %73 = vector.load %arg6[%c0_31, %c0_32, %c0_33] : memref<1x16x128xf32, #tpu.memory_space<vmem>>, vector<1x16x128xf32>
    %74 = vector.shape_cast %73 : vector<1x16x128xf32> to vector<16x128xf32>
    %75 = vector.shape_cast %72 : vector<16x128xf32> to vector<1x16x128xf32>
    tpu.vector_store %arg6[%c0_31, %c0_32, %c0_33], %75 {strides = array<i32>} : memref<1x16x128xf32, #tpu.memory_space<vmem>>, vector<1x16x128xf32>,
    return
  }
  func.func @transform_0(%arg0: i32) -> (i32, i32, i32) {
    %c0_i32 = arith.constant 0 : i32
    %c0_i32_0 = arith.constant 0 : i32
    %c0_i32_1 = arith.constant 0 : i32
    return %arg0, %c0_i32, %c0_i32_0 : i32, i32, i32
  }
  func.func @transform_1(%arg0: i32) -> (i32, i32, i32) {
    %c0_i32 = arith.constant 0 : i32
    %c0_i32_0 = arith.constant 0 : i32
    %c0_i32_1 = arith.constant 0 : i32
    return %arg0, %c0_i32, %c0_i32_0 : i32, i32, i32
  }
  func.func @transform_2(%arg0: i32) -> (i32, i32, i32, i32) {
    %c0_i32 = arith.constant 0 : i32
    %c0_i32_0 = arith.constant 0 : i32
    %c0_i32_1 = arith.constant 0 : i32
    %c0_i32_2 = arith.constant 0 : i32
    return %arg0, %c0_i32, %c0_i32_0, %c0_i32_1 : i32, i32, i32, i32
  }
  func.func @transform_3(%arg0: i32) -> (i32, i32, i32) {
    %c0_i32 = arith.constant 0 : i32
    %c0_i32_0 = arith.constant 0 : i32
    %c0_i32_1 = arith.constant 0 : i32
    %c0_i32_2 = arith.constant 0 : i32
    return %c0_i32, %c0_i32_0, %c0_i32_1 : i32, i32, i32
  }
  func.func @transform_4(%arg0: i32) -> (i32, i32, i32) {
    %c0_i32 = arith.constant 0 : i32
    %c0_i32_0 = arith.constant 0 : i32
    %c0_i32_1 = arith.constant 0 : i32
    %c0_i32_2 = arith.constant 0 : i32
    return %c0_i32, %c0_i32_0, %c0_i32_1 : i32, i32, i32
  }
  func.func @transform_5(%arg0: i32) -> (i32, i32, i32) {
    %c0_i32 = arith.constant 0 : i32
    %c0_i32_0 = arith.constant 0 : i32
    %c0_i32_1 = arith.constant 0 : i32
    return %arg0, %c0_i32, %c0_i32_0 : i32, i32, i32
  }
}

</mosaic_0001>

<llo_original>
// kernel: tpu_custom_call.1
$region0: #{tpu_custom_call.1}
  #allocation0 [shape = 'u32[]', space=smem, size = 0x4, offset = 0x4, fixed_abs, tag = 'smem constant byte address 0x4 - core index']
  #allocation1 [shape = 'u32[144,128]{1,0:T(1,128)}', space=vmem, size = 0x12000, scoped, tag = 'internal scratch']
  %s0 = inlined_call_operand.vmem [shape: f32[2,64,32], index: 0, kind: input, shape index: {}]
  %s1 = inlined_call_operand.hbm [shape: f32[2,64,256], index: 1, kind: input, shape index: {}]
  %s2 = inlined_call_operand.hbm [shape: f32[2,2,64,128], index: 2, kind: input, shape index: {}]
  %s3 = inlined_call_operand.vmem [shape: f32[2,32,128], index: 3, kind: input, shape index: {}]
  %s4 = inlined_call_operand.vmem [shape: f32[2,64,128], index: 4, kind: input, shape index: {}]
  %s5 = inlined_call_operand.hbm [shape: f32[2,16,128], index: 5, kind: output, shape index: {}]
  %s6 = sld [smem:[#allocation0]]
  $region61: #{tpu_custom_call.1} parent=0
    _
  %s8 = ssub.s32 1, %s6
  %s9 = scalar_select 0, %s8, %s6
  $region1: #{tpu_custom_call.1} parent=0
    #allocation2 [shape = 'u8[131072]{0}', space=vmem, size = 0x20000, scoped, tag = 'input window, operand 1']
    #allocation3 [shape = 's32[2]{0}', space=sflag, size = 0x8, scoped, tag = 'scoped memory for tpu_custom_call.1']
    #allocation4 [shape = 's32[2]{0}', space=sflag, size = 0x8, scoped, tag = 'scoped memory for tpu_custom_call.1']
    #allocation5 [shape = 'u8[131072]{0}', space=vmem, size = 0x20000, scoped, tag = 'input window, operand 2']
    #allocation6 [shape = 's32[2]{0}', space=sflag, size = 0x8, scoped, tag = 'scoped memory for tpu_custom_call.1']
    #allocation7 [shape = 'u8[16384]{0}', space=vmem, size = 0x4000, scoped, tag = 'output window, operand 0']
    %10 = vsyncpa [#allocation3], 0
    %s11 = scalar_lea.sflag [#allocation3], 1
    %12 = vsyncpa %s11, 0
    %13 = vsyncpa [#allocation6], 0
    %s14 = scalar_lea.sflag [#allocation6], 1
    %15 = vsyncpa %s14, 0
    %16 = vsyncpa [#allocation4], 0
    %s17 = scalar_lea.sflag [#allocation4], 1
    %18 = vsyncpa %s17, 0
    loop: start=0, step=1, limit=4
    $region2: #{tpu_custom_call.1} parent=1 // loop_pre_header
      _
    $region3: #{tpu_custom_call.1} parent=1 // loop_header
      %s20 = sphi 0, %s24
      %p21 = scmp.ge.s32.totalorder %s20, 4
      %s30 = sphi 0, %s32
      %s33 = sphi 0, %s30
      %s34 = sphi 0, %s33
      %s50 = sphi 0, %s34
      %s56 = sphi 0, %s58
      %s59 = sphi 0, %s56
      %s60 = sphi 0, %s59
      %s76 = sphi 0, %s60
      %s82 = sphi 0, %s84
      %s85 = sphi 0, %s82
      %s86 = sphi 0, %s85
      %s102 = sphi 0, %s86
      %s106 = sphi 0, %s106
      %s108 = sphi 0, %s106
      %s109 = sphi 0, %s108
      %s123 = sphi 0, %s109
      %s127 = sphi 0, %s127
      %s129 = sphi 0, %s127
      %s130 = sphi 0, %s129
      %s144 = sphi 0, %s130
      %s150 = sphi 0, %s152
      %s153 = sphi 0, %s150
      %s154 = sphi 0, %s153
      %s170 = sphi 0, %s154
    $region4: #{tpu_custom_call.1} parent=1 // loop_header_branch
      %23 = sbr.rel (%p21) target = $region8
    $region5: #{tpu_custom_call.1} parent=1 // loop_body
      %s25 = ssub.s32 %s20, 1
      %s26 = ssub.s32 %s20, 2
      %s27 = sadd.s32 %s20, 1
      %s28 = ssub.s32 %s20, %s27
      %p29 = scmp.eq.s32.totalorder %s28, 0
      %s31 = sadd.s32 %s30, 1
      %s32 = scalar_select %p29, %s30, %s31
      %p35 = pneg %p29
      %p36 = scmp.eq.s32.totalorder %s20, 1
      %p37 = por %p35, %p36
      %p38 = scmp.ne.s32.totalorder %s30, %s33
      %p39 = scmp.eq.s32.totalorder %s20, 0
      %p40 = por %p38, %p39
      %p41 = scmp.ne.s32.totalorder %s30, %s33
      %p42 = scmp.eq.s32.totalorder %s25, 1
      %p43 = por %p41, %p42
      %p44 = scmp.ne.s32.totalorder %s33, %s34
      %p45 = scmp.eq.s32.totalorder %s25, 0
      %p46 = por %p44, %p45
      %p47 = scmp.ne.s32.totalorder %s33, %s34
      %p48 = scmp.eq.s32.totalorder %s26, 1
      %p49 = por %p47, %p48
      %p51 = scmp.ne.s32.totalorder %s34, %s50
      %p52 = scmp.eq.s32.totalorder %s26, 0
      %p53 = por %p51, %p52
      %s54 = ssub.s32 %s20, %s27
      %p55 = scmp.eq.s32.totalorder %s54, 0
      %s57 = sadd.s32 %s56, 1
      %s58 = scalar_select %p55, %s56, %s57
      %p61 = pneg %p55
      %p62 = scmp.eq.s32.totalorder %s20, 1
      %p63 = por %p61, %p62
      %p64 = scmp.ne.s32.totalorder %s56, %s59
      %p65 = scmp.eq.s32.totalorder %s20, 0
      %p66 = por %p64, %p65
      %p67 = scmp.ne.s32.totalorder %s56, %s59
      %p68 = scmp.eq.s32.totalorder %s25, 1
      %p69 = por %p67, %p68
      %p70 = scmp.ne.s32.totalorder %s59, %s60
      %p71 = scmp.eq.s32.totalorder %s25, 0
      %p72 = por %p70, %p71
      %p73 = scmp.ne.s32.totalorder %s59, %s60
      %p74 = scmp.eq.s32.totalorder %s26, 1
      %p75 = por %p73, %p74
      %p77 = scmp.ne.s32.totalorder %s60, %s76
      %p78 = scmp.eq.s32.totalorder %s26, 0
      %p79 = por %p77, %p78
      %s80 = ssub.s32 %s20, %s27
      %p81 = scmp.eq.s32.totalorder %s80, 0
      %s83 = sadd.s32 %s82, 1
      %s84 = scalar_select %p81, %s82, %s83
      %p87 = pneg %p81
      %p88 = scmp.eq.s32.totalorder %s20, 1
      %p89 = por %p87, %p88
      %p90 = scmp.ne.s32.totalorder %s82, %s85
      %p91 = scmp.eq.s32.totalorder %s20, 0
      %p92 = por %p90, %p91
      %p93 = scmp.ne.s32.totalorder %s82, %s85
      %p94 = scmp.eq.s32.totalorder %s25, 1
      %p95 = por %p93, %p94
      %p96 = scmp.ne.s32.totalorder %s85, %s86
      %p97 = scmp.eq.s32.totalorder %s25, 0
      %p98 = por %p96, %p97
      %p99 = scmp.ne.s32.totalorder %s85, %s86
      %p100 = scmp.eq.s32.totalorder %s26, 1
      %p101 = por %p99, %p100
      %p103 = scmp.ne.s32.totalorder %s86, %s102
      %p104 = scmp.eq.s32.totalorder %s26, 0
      %p105 = por %p103, %p104
      %s107 = sadd.s32 %s106, 1
      %p110 = scmp.eq.s32.totalorder %s20, 1
      %p111 = scmp.ne.s32.totalorder %s106, %s108
      %p112 = scmp.eq.s32.totalorder %s20, 0
      %p113 = por %p111, %p112
      %p114 = scmp.ne.s32.totalorder %s106, %s108
      %p115 = scmp.eq.s32.totalorder %s25, 1
      %p116 = por %p114, %p115
      %p117 = scmp.ne.s32.totalorder %s108, %s109
      %p118 = scmp.eq.s32.totalorder %s25, 0
      %p119 = por %p117, %p118
      %p120 = scmp.ne.s32.totalorder %s108, %s109
      %p121 = scmp.eq.s32.totalorder %s26, 1
      %p122 = por %p120, %p121
      %p124 = scmp.ne.s32.totalorder %s109, %s123
      %p125 = scmp.eq.s32.totalorder %s26, 0
      %p126 = por %p124, %p125
      %s128 = sadd.s32 %s127, 1
      %p131 = scmp.eq.s32.totalorder %s20, 1
      %p132 = scmp.ne.s32.totalorder %s127, %s129
      %p133 = scmp.eq.s32.totalorder %s20, 0
      %p134 = por %p132, %p133
      %p135 = scmp.ne.s32.totalorder %s127, %s129
      %p136 = scmp.eq.s32.totalorder %s25, 1
      %p137 = por %p135, %p136
      %p138 = scmp.ne.s32.totalorder %s129, %s130
      %p139 = scmp.eq.s32.totalorder %s25, 0
      %p140 = por %p138, %p139
      %p141 = scmp.ne.s32.totalorder %s129, %s130
      %p142 = scmp.eq.s32.totalorder %s26, 1
      %p143 = por %p141, %p142
      %p145 = scmp.ne.s32.totalorder %s130, %s144
      %p146 = scmp.eq.s32.totalorder %s26, 0
      %p147 = por %p145, %p146
      %s148 = ssub.s32 %s20, %s27
      %p149 = scmp.eq.s32.totalorder %s148, 0
      %s151 = sadd.s32 %s150, 1
      %s152 = scalar_select %p149, %s150, %s151
      %p155 = pneg %p149
      %p156 = scmp.eq.s32.totalorder %s20, 1
      %p157 = por %p155, %p156
      %p158 = scmp.ne.s32.totalorder %s150, %s153
      %p159 = scmp.eq.s32.totalorder %s20, 0
      %p160 = por %p158, %p159
      %p161 = scmp.ne.s32.totalorder %s150, %s153
      %p162 = scmp.eq.s32.totalorder %s25, 1
      %p163 = por %p161, %p162
      %p164 = scmp.ne.s32.totalorder %s153, %s154
      %p165 = scmp.eq.s32.totalorder %s25, 0
      %p166 = por %p164, %p165
      %p167 = scmp.ne.s32.totalorder %s153, %s154
      %p168 = scmp.eq.s32.totalorder %s26, 1
      %p169 = por %p167, %p168
      %p171 = scmp.ne.s32.totalorder %s154, %s170
      %p172 = scmp.eq.s32.totalorder %s26, 0
      %p173 = por %p171, %p172
      %p174 = scmp.le.s32.totalorder 1, %s20
      %p175 = scmp.lt.s32.totalorder %s20, 3
      %p176 = pnand %p174, %p175
      %p177 = pneg %p176
      // Predicated region
      $region9: #{tpu_custom_call.1} parent=5 // pred_check
        _
      $region10: #{tpu_custom_call.1} parent=5 // pred_check_branch
        %179 = sbr.rel (%p176) target = $region12
      $region11: #{tpu_custom_call.1} parent=5 // pred_region
        %s180 = ssub.s32 %s20, 1
        // Predicated region
        $region13: #{tpu_custom_call.1} parent=11 // pred_check
          %p181 = pneg %p119
        $region14: #{tpu_custom_call.1} parent=11 // pred_check_branch
          %183 = sbr.rel (%p181) target = $region16
        $region15: #{tpu_custom_call.1} parent=11 // pred_region
          _
        $region16: #{tpu_custom_call.1} parent=11 // pred_fallthru
          _
        // Predicated region
        $region17: #{tpu_custom_call.1} parent=11 // pred_check
          %p184 = pneg %p140
        $region18: #{tpu_custom_call.1} parent=11 // pred_check_branch
          %186 = sbr.rel (%p184) target = $region20
        $region19: #{tpu_custom_call.1} parent=11 // pred_region
          _
        $region20: #{tpu_custom_call.1} parent=11 // pred_fallthru
          _
      $region12: #{tpu_custom_call.1} parent=5 // pred_fallthru
        _
      %p187 = scmp.lt.s32.totalorder %s20, 2
      // Predicated region
      $region21: #{tpu_custom_call.1} parent=5 // pred_check
        %p188 = pneg %p187
      $region22: #{tpu_custom_call.1} parent=5 // pred_check_branch
        %190 = sbr.rel (%p188) target = $region24
      $region23: #{tpu_custom_call.1} parent=5 // pred_region
        // Predicated region
        $region25: #{tpu_custom_call.1} parent=23 // pred_check
          %p191 = pneg %p40
        $region26: #{tpu_custom_call.1} parent=23 // pred_check_branch
          %193 = sbr.rel (%p191) target = $region28
        $region27: #{tpu_custom_call.1} parent=23 // pred_region
          %p194 = scmp.lt.s32.totalorder %s20, 1
          %s195 = scalar_select %p194, %s20, 1
          %s196 = smul.addr %s195, 8
          %s197 = smul.addr %s196, 8
          %s198 = scalar_lea.vmem %s0, %s197
        $region28: #{tpu_custom_call.1} parent=23 // pred_fallthru
          _
        // Predicated region
        $region29: #{tpu_custom_call.1} parent=23 // pred_check
          %p199 = pneg %p66
        $region30: #{tpu_custom_call.1} parent=23 // pred_check_branch
          %201 = sbr.rel (%p199) target = $region32
        $region31: #{tpu_custom_call.1} parent=23 // pred_region
          %s202 = sand.u32 %s56, 1
          %s203 = scalar_lea.sflag [#allocation3], %s202
          %s204 = sand.u32 %s56, 1
          %s205 = smul.addr %s204, 128
          %s206 = scalar_lea.vmem [#allocation2], %s205
          %s208 = ssub.s32 2048, 2048
          %209 = vsyncadd %s203, %s208
          %s210 = smul.addr %s20, 16
          %s211 = smul.addr %s210, 128
          %s212 = scalar_lea.hbm %s1, %s211
          %s213 = sshll.u32 %s206, 4
          %s214 = int_to_ptr.vmem [resolvable:$true] %s213
          %219 = dma.hbm_to_vmem [thread:$0]  %s212, 2048, %s214, %s203, 256, 256, 16
        $region32: #{tpu_custom_call.1} parent=23 // pred_fallthru
          _
        // Predicated region
        $region33: #{tpu_custom_call.1} parent=23 // pred_check
          %p220 = pneg %p92
        $region34: #{tpu_custom_call.1} parent=23 // pred_check_branch
          %222 = sbr.rel (%p220) target = $region36
        $region35: #{tpu_custom_call.1} parent=23 // pred_region
          %s223 = sand.u32 %s82, 1
          %s224 = scalar_lea.sflag [#allocation6], %s223
          %s225 = sand.u32 %s82, 1
          %s226 = smul.addr %s225, 128
          %s227 = scalar_lea.vmem [#allocation5], %s226
          %s229 = ssub.s32 2048, 2048
          %230 = vsyncadd %s224, %s229
          %s231 = smul.addr %s20, 16
          %s232 = smul.addr %s231, 128
          %s233 = scalar_lea.hbm %s2, %s232
          %s234 = sshll.u32 %s227, 4
          %s235 = int_to_ptr.vmem [resolvable:$true] %s234
          %240 = dma.hbm_to_vmem [thread:$0]  %s233, 2048, %s235, %s224, 128, 128, 8
        $region36: #{tpu_custom_call.1} parent=23 // pred_fallthru
          _
      $region24: #{tpu_custom_call.1} parent=5 // pred_fallthru
        _
      %p241 = scmp.le.s32.totalorder 1, %s20
      %p242 = scmp.lt.s32.totalorder %s20, 3
      %p243 = pnand %p241, %p242
      %p244 = pneg %p243
      // Predicated region
      $region37: #{tpu_custom_call.1} parent=5 // pred_check
        _
      $region38: #{tpu_custom_call.1} parent=5 // pred_check_branch
        %246 = sbr.rel (%p243) target = $region40
      $region39: #{tpu_custom_call.1} parent=5 // pred_region
        %s247 = ssub.s32 %s20, 1
        %s248 = sand.u32 %s59, 1
        %s249 = scalar_lea.sflag [#allocation3], %s248
        %s250 = sand.u32 %s59, 1
        %s251 = smul.addr %s250, 128
        %s252 = scalar_lea.vmem [#allocation2], %s251
        // Predicated region
        $region41: #{tpu_custom_call.1} parent=39 // pred_check
          %p253 = pneg %p72
        $region42: #{tpu_custom_call.1} parent=39 // pred_check_branch
          %255 = sbr.rel (%p253) target = $region44
        $region43: #{tpu_custom_call.1} parent=39 // pred_region
          %256 = dma.done %s249, 2048
        $region44: #{tpu_custom_call.1} parent=39 // pred_fallthru
          _
        %s257 = sand.u32 %s85, 1
        %s258 = scalar_lea.sflag [#allocation6], %s257
        %s259 = sand.u32 %s85, 1
        %s260 = smul.addr %s259, 128
        %s261 = scalar_lea.vmem [#allocation5], %s260
        // Predicated region
        $region45: #{tpu_custom_call.1} parent=39 // pred_check
          %p262 = pneg %p98
        $region46: #{tpu_custom_call.1} parent=39 // pred_check_branch
          %264 = sbr.rel (%p262) target = $region48
        $region47: #{tpu_custom_call.1} parent=39 // pred_region
          %265 = dma.done %s258, 2048
        $region48: #{tpu_custom_call.1} parent=39 // pred_fallthru
          _
        %p266 = scmp.lt.s32.totalorder %s25, 1
        %s267 = scalar_select %p266, %s25, 1
        %s268 = smul.addr %s267, 8
        %s269 = smul.addr %s268, 8
        %s270 = scalar_lea.vmem %s0, %s269
        %p271 = pneg %p46
        %p272 = pneg %p43
        %s273 = sand.u32 %s59, 1
        %s274 = scalar_lea.sflag [#allocation3], %s273
        %s275 = sand.u32 %s59, 1
        %s276 = smul.addr %s275, 128
        %s277 = scalar_lea.vmem [#allocation2], %s276
        %p278 = pneg %p72
        %p279 = pneg %p69
        %s280 = sand.u32 %s85, 1
        %s281 = scalar_lea.sflag [#allocation6], %s280
        %s282 = sand.u32 %s85, 1
        %s283 = smul.addr %s282, 128
        %s284 = scalar_lea.vmem [#allocation5], %s283
        %p285 = pneg %p98
        %p286 = pneg %p95
        %p287 = pneg %p119
        %p288 = pneg %p116
        %p289 = pneg %p140
        %p290 = pneg %p137
        %p291 = pneg %p166
        %p292 = pneg %p163
        %s293 = sand.u32 %s153, 1
        %s294 = scalar_lea.sflag [#allocation4], %s293
        %s295 = sand.u32 %s153, 1
        %s296 = smul.addr %s295, 16
        %s297 = scalar_lea.vmem [#allocation7], %s296
        %p298 = scmp.lt.s32.totalorder %s25, 1
        %s299 = scalar_select %p298, %s25, 1
        %s300 = smul.addr %s299, 8
        %s301 = smul.addr %s300, 8
        %s302 = scalar_lea.vmem %s0, %s301
        %v303 = vld [vmem:[%s302] sm:$0xff]
        %v304 = vld [vmem:[%s302 + $0x8] sm:$0xff]
        %v305 = vld [vmem:[%s302 + $0x10] sm:$0xff]
        %v306 = vld [vmem:[%s302 + $0x18] sm:$0xff]
        %v307 = vld [vmem:[%s302 + $0x20] sm:$0xff]
        %v308 = vld [vmem:[%s302 + $0x28] sm:$0xff]
        %v309 = vld [vmem:[%s302 + $0x30] sm:$0xff]
        %v310 = vld [vmem:[%s302 + $0x38] sm:$0xff]
        %v311 = vld [vmem:[%s252] sm:$0xff]
        %v312 = vld [vmem:[%s252 + $0x8] sm:$0xff]
        %v313 = vld [vmem:[%s252 + $0x10] sm:$0xff]
        %v314 = vld [vmem:[%s252 + $0x18] sm:$0xff]
        %v315 = vld [vmem:[%s252 + $0x20] sm:$0xff]
        %v316 = vld [vmem:[%s252 + $0x28] sm:$0xff]
        %v317 = vld [vmem:[%s252 + $0x30] sm:$0xff]
        %v318 = vld [vmem:[%s252 + $0x38] sm:$0xff]
        %v319 = vld [vmem:[%s252 + $0x40] sm:$0xff]
        %v320 = vld [vmem:[%s252 + $0x48] sm:$0xff]
        %v321 = vld [vmem:[%s252 + $0x50] sm:$0xff]
        %v322 = vld [vmem:[%s252 + $0x58] sm:$0xff]
        %v323 = vld [vmem:[%s252 + $0x60] sm:$0xff]
        %v324 = vld [vmem:[%s252 + $0x68] sm:$0xff]
        %v325 = vld [vmem:[%s252 + $0x70] sm:$0xff]
        %v326 = vld [vmem:[%s252 + $0x78] sm:$0xff]
        %v327 = vld [vmem:[%s3] sm:$0xff]
        %v328 = vld [vmem:[%s3 + $0x8] sm:$0xff]
        %v329 = vld [vmem:[%s3 + $0x10] sm:$0xff]
        %v330 = vld [vmem:[%s3 + $0x18] sm:$0xff]
        %vm331 = vcmask 261120
        %v333 = vsel %vm331, %v303, 0
        %v336 = vsel %vm331, %v304, 0
        %v339 = vsel %vm331, %v305, 0
        %v342 = vsel %vm331, %v306, 0
        %v345 = vsel %vm331, %v307, 0
        %v348 = vsel %vm331, %v308, 0
        %v351 = vsel %vm331, %v309, 0
        %v354 = vsel %vm331, %v310, 0
        %356 = vmatprep.subr.mxu0 0.0
        %357 = vmatpush1.msra.mxu0 %v327
        %358 = vmatprep.subr.mxu0 0.0
        %359 = vmatpush1.msra.mxu0 %v328
        %360 = vmatprep.subr.mxu0 0.0
        %361 = vmatpush1.msra.mxu0 %v329
        %362 = vmatprep.subr.mxu0 0.0
        %363 = vmatpush1.msra.mxu0 %v330
        %364 = vmatprep.subr.mxu0 0.0
        %365 = vmatpush1.msra.mxu0 0.0
        %366 = vmatprep.subr.mxu0 0.0
        %367 = vmatpush1.msra.mxu0 0.0
        %368 = vmatprep.subr.mxu0 0.0
        %369 = vmatpush1.msra.mxu0 0.0
        %370 = vmatprep.subr.mxu0 0.0
        %371 = vmatpush1.msra.mxu0 0.0
        %372 = vmatprep.subr.mxu0 0.0
        %373 = vmatpush1.msra.mxu0 0.0
        %374 = vmatprep.subr.mxu0 0.0
        %375 = vmatpush1.msra.mxu0 0.0
        %376 = vmatprep.subr.mxu0 0.0
        %377 = vmatpush1.msra.mxu0 0.0
        %378 = vmatprep.subr.mxu0 0.0
        %379 = vmatpush1.msra.mxu0 0.0
        %380 = vmatprep.subr.mxu0 0.0
        %381 = vmatpush1.msra.mxu0 0.0
        %382 = vmatprep.subr.mxu0 0.0
        %383 = vmatpush1.msra.mxu0 0.0
        %384 = vmatprep.subr.mxu0 0.0
        %385 = vmatpush1.msra.mxu0 0.0
        %386 = vmatprep.subr.mxu0 0.0
        %387 = vmatpush1.msra.mxu0 0.0
        %388 = vmatprep.subr.mxu0 0.0
        %389 = vmatpush1.msra.mxu0 0.0
        %390 = vmatprep.subr.mxu0 0.0
        %391 = vmatpush1.msra.mxu0 0.0
        %392 = vmatprep.subr.mxu0 0.0
        %393 = vmatpush1.msra.mxu0 0.0
        %394 = vmatprep.subr.mxu0 0.0
        %395 = vmatpush1.msra.mxu0 0.0
        %396 = vmatprep.subr.mxu0 0.0
        %397 = vmatpush1.msra.mxu0 0.0
        %398 = vmatprep.subr.mxu0 0.0
        %399 = vmatpush1.msra.mxu0 0.0
        %400 = vmatprep.subr.mxu0 0.0
        %401 = vmatpush1.msra.mxu0 0.0
        %402 = vmatprep.subr.mxu0 0.0
        %403 = vmatpush1.msra.mxu0 0.0
        %404 = vmatprep.subr.mxu0 0.0
        %405 = vmatpush1.msra.mxu0 0.0
        %406 = vmatprep.subr.mxu0 0.0
        %407 = vmatpush1.msra.mxu0 0.0
        %408 = vmatprep.subr.mxu0 0.0
        %409 = vmatpush1.msra.mxu0 0.0
        %410 = vmatprep.subr.mxu0 0.0
        %411 = vmatpush1.msra.mxu0 0.0
        %412 = vmatprep.subr.mxu0 0.0
        %413 = vmatpush1.msra.mxu0 0.0
        %414 = vmatprep.subr.mxu0 0.0
        %415 = vmatpush1.msra.mxu0 0.0
        %416 = vmatprep.subr.mxu0 0.0
        %417 = vmatpush1.msra.mxu0 0.0
        %418 = vmatprep.subr.mxu0 0.0
        %419 = vmatpush1.msra.mxu0 0.0
        %420 = vmatprep.mubr.f32.mxu0 0.0
        %421 = vmatmul.mubr.f32.gmra.mrb[0].mxu0 %v333
        %v422 = vpop.f32.mrb[0].mxu0
        %v423 = vadd.f32 0.0, %v422
        %v424 = vpop.f32.mrb[0].mxu0
        %425 = vmatprep.mubr.f32.mxu0 0.0
        %426 = vmatmul.mubr.f32.gmra.mrb[0].mxu0 %v336
        %v427 = vpop.f32.mrb[0].mxu0
        %v428 = vadd.f32 0.0, %v427
        %v429 = vpop.f32.mrb[0].mxu0
        %430 = vmatprep.mubr.f32.mxu0 0.0
        %431 = vmatmul.mubr.f32.gmra.mrb[0].mxu0 %v339
        %v432 = vpop.f32.mrb[0].mxu0
        %v433 = vadd.f32 0.0, %v432
        %v434 = vpop.f32.mrb[0].mxu0
        %435 = vmatprep.mubr.f32.mxu0 0.0
        %436 = vmatmul.mubr.f32.gmra.mrb[0].mxu0 %v342
        %v437 = vpop.f32.mrb[0].mxu0
        %v438 = vadd.f32 0.0, %v437
        %v439 = vpop.f32.mrb[0].mxu0
        %440 = vmatprep.mubr.f32.mxu0 0.0
        %441 = vmatmul.mubr.f32.gmra.mrb[0].mxu0 %v345
        %v442 = vpop.f32.mrb[0].mxu0
        %v443 = vadd.f32 0.0, %v442
        %v444 = vpop.f32.mrb[0].mxu0
        %445 = vmatprep.mubr.f32.mxu0 0.0
        %446 = vmatmul.mubr.f32.gmra.mrb[0].mxu0 %v348
        %v447 = vpop.f32.mrb[0].mxu0
        %v448 = vadd.f32 0.0, %v447
        %v449 = vpop.f32.mrb[0].mxu0
        %450 = vmatprep.mubr.f32.mxu0 0.0
        %451 = vmatmul.mubr.f32.gmra.mrb[0].mxu0 %v351
        %v452 = vpop.f32.mrb[0].mxu0
        %v453 = vadd.f32 0.0, %v452
        %v454 = vpop.f32.mrb[0].mxu0
        %455 = vmatprep.mubr.f32.mxu0 0.0
        %456 = vmatmul.mubr.f32.gmra.mrb[0].mxu0 %v354
        %v457 = vpop.f32.mrb[0].mxu0
        %v458 = vadd.f32 0.0, %v457
        %v459 = vpop.f32.mrb[0].mxu0
        %460 = vdwg.mxu0
        %469 = vrot.lane.b32.xlu0 %v423, 96
        %v470 = vpop.permute.xlu0 %469
        %471 = vrot.lane.b32.xlu0 %v428, 96
        %v472 = vpop.permute.xlu0 %471
        %473 = vrot.lane.b32.xlu0 %v433, 96
        %v474 = vpop.permute.xlu0 %473
        %475 = vrot.lane.b32.xlu0 %v438, 96
        %v476 = vpop.permute.xlu0 %475
        %477 = vrot.lane.b32.xlu0 %v443, 96
        %v478 = vpop.permute.xlu0 %477
        %479 = vrot.lane.b32.xlu0 %v448, 96
        %v480 = vpop.permute.xlu0 %479
        %481 = vrot.lane.b32.xlu0 %v453, 96
        %v482 = vpop.permute.xlu0 %481
        %483 = vrot.lane.b32.xlu0 %v458, 96
        %v484 = vpop.permute.xlu0 %483
        %493 = vrot.lane.b32.xlu0 %v423, 64
        %v494 = vpop.permute.xlu0 %493
        %495 = vrot.lane.b32.xlu0 %v428, 64
        %v496 = vpop.permute.xlu0 %495
        %497 = vrot.lane.b32.xlu0 %v433, 64
        %v498 = vpop.permute.xlu0 %497
        %499 = vrot.lane.b32.xlu0 %v438, 64
        %v500 = vpop.permute.xlu0 %499
        %501 = vrot.lane.b32.xlu0 %v443, 64
        %v502 = vpop.permute.xlu0 %501
        %503 = vrot.lane.b32.xlu0 %v448, 64
        %v504 = vpop.permute.xlu0 %503
        %505 = vrot.lane.b32.xlu0 %v453, 64
        %v506 = vpop.permute.xlu0 %505
        %507 = vrot.lane.b32.xlu0 %v458, 64
        %v508 = vpop.permute.xlu0 %507
        %517 = vrot.lane.b32.xlu0 %v423, 32
        %v518 = vpop.permute.xlu0 %517
        %519 = vrot.lane.b32.xlu0 %v428, 32
        %v520 = vpop.permute.xlu0 %519
        %521 = vrot.lane.b32.xlu0 %v433, 32
        %v522 = vpop.permute.xlu0 %521
        %523 = vrot.lane.b32.xlu0 %v438, 32
        %v524 = vpop.permute.xlu0 %523
        %525 = vrot.lane.b32.xlu0 %v443, 32
        %v526 = vpop.permute.xlu0 %525
        %527 = vrot.lane.b32.xlu0 %v448, 32
        %v528 = vpop.permute.xlu0 %527
        %529 = vrot.lane.b32.xlu0 %v453, 32
        %v530 = vpop.permute.xlu0 %529
        %531 = vrot.lane.b32.xlu0 %v458, 32
        %v532 = vpop.permute.xlu0 %531
        %541 = vmatprep.subr.mxu0 0.0
        %542 = vmatpush1.msra.mxu0 %v423
        %543 = vmatprep.subr.mxu0 0.0
        %544 = vmatpush1.msra.mxu0 %v428
        %545 = vmatprep.subr.mxu0 0.0
        %546 = vmatpush1.msra.mxu0 %v433
        %547 = vmatprep.subr.mxu0 0.0
        %548 = vmatpush1.msra.mxu0 %v438
        %549 = vmatprep.subr.mxu0 0.0
        %550 = vmatpush1.msra.mxu0 %v443
        %551 = vmatprep.subr.mxu0 0.0
        %552 = vmatpush1.msra.mxu0 %v448
        %553 = vmatprep.subr.mxu0 0.0
        %554 = vmatpush1.msra.mxu0 %v453
        %555 = vmatprep.subr.mxu0 0.0
        %556 = vmatpush1.msra.mxu0 %v458
        %557 = vmatprep.subr.mxu0 0.0
        %558 = vmatpush1.msra.mxu0 %v470
        %559 = vmatprep.subr.mxu0 0.0
        %560 = vmatpush1.msra.mxu0 %v472
        %561 = vmatprep.subr.mxu0 0.0
        %562 = vmatpush1.msra.mxu0 %v474
        %563 = vmatprep.subr.mxu0 0.0
        %564 = vmatpush1.msra.mxu0 %v476
        %565 = vmatprep.subr.mxu0 0.0
        %566 = vmatpush1.msra.mxu0 %v478
        %567 = vmatprep.subr.mxu0 0.0
        %568 = vmatpush1.msra.mxu0 %v480
        %569 = vmatprep.subr.mxu0 0.0
        %570 = vmatpush1.msra.mxu0 %v482
        %571 = vmatprep.subr.mxu0 0.0
        %572 = vmatpush1.msra.mxu0 %v484
        %573 = vmatprep.subr.mxu0 0.0
        %574 = vmatpush1.msra.mxu0 %v494
        %575 = vmatprep.subr.mxu0 0.0
        %576 = vmatpush1.msra.mxu0 %v496
        %577 = vmatprep.subr.mxu0 0.0
        %578 = vmatpush1.msra.mxu0 %v498
        %579 = vmatprep.subr.mxu0 0.0
        %580 = vmatpush1.msra.mxu0 %v500
        %581 = vmatprep.subr.mxu0 0.0
        %582 = vmatpush1.msra.mxu0 %v502
        %583 = vmatprep.subr.mxu0 0.0
        %584 = vmatpush1.msra.mxu0 %v504
        %585 = vmatprep.subr.mxu0 0.0
        %586 = vmatpush1.msra.mxu0 %v506
        %587 = vmatprep.subr.mxu0 0.0
        %588 = vmatpush1.msra.mxu0 %v508
        %589 = vmatprep.subr.mxu0 0.0
        %590 = vmatpush1.msra.mxu0 %v518
        %591 = vmatprep.subr.mxu0 0.0
        %592 = vmatpush1.msra.mxu0 %v520
        %593 = vmatprep.subr.mxu0 0.0
        %594 = vmatpush1.msra.mxu0 %v522
        %595 = vmatprep.subr.mxu0 0.0
        %596 = vmatpush1.msra.mxu0 %v524
        %597 = vmatprep.subr.mxu0 0.0
        %598 = vmatpush1.msra.mxu0 %v526
        %599 = vmatprep.subr.mxu0 0.0
        %600 = vmatpush1.msra.mxu0 %v528
        %601 = vmatprep.subr.mxu0 0.0
        %602 = vmatpush1.msra.mxu0 %v530
        %603 = vmatprep.subr.mxu0 0.0
        %604 = vmatpush1.msra.mxu0 %v532
        %605 = vmatprep.mubr.f32.mxu0 %v312
        %606 = vmatmul.mubr.f32.gmra.mrb[0].mxu0 %v311
        %v607 = vpop.f32.mrb[0].mxu0
        %v608 = vadd.f32 0.0, %v607
        %v609 = vpop.f32.mrb[0].mxu0
        %610 = vmatprep.mubr.f32.mxu0 %v314
        %611 = vmatmul.mubr.f32.gmra.mrb[0].mxu0 %v313
        %v612 = vpop.f32.mrb[0].mxu0
        %v613 = vadd.f32 0.0, %v612
        %v614 = vpop.f32.mrb[0].mxu0
        %615 = vmatprep.mubr.f32.mxu0 %v316
        %616 = vmatmul.mubr.f32.gmra.mrb[0].mxu0 %v315
        %v617 = vpop.f32.mrb[0].mxu0
        %v618 = vadd.f32 0.0, %v617
        %v619 = vpop.f32.mrb[0].mxu0
        %620 = vmatprep.mubr.f32.mxu0 %v318
        %621 = vmatmul.mubr.f32.gmra.mrb[0].mxu0 %v317
        %v622 = vpop.f32.mrb[0].mxu0
        %v623 = vadd.f32 0.0, %v622
        %v624 = vpop.f32.mrb[0].mxu0
        %625 = vmatprep.mubr.f32.mxu0 %v320
        %626 = vmatmul.mubr.f32.gmra.mrb[0].mxu0 %v319
        %v627 = vpop.f32.mrb[0].mxu0
        %v628 = vadd.f32 0.0, %v627
        %v629 = vpop.f32.mrb[0].mxu0
        %630 = vmatprep.mubr.f32.mxu0 %v322
        %631 = vmatmul.mubr.f32.gmra.mrb[0].mxu0 %v321
        %v632 = vpop.f32.mrb[0].mxu0
        %v633 = vadd.f32 0.0, %v632
        %v634 = vpop.f32.mrb[0].mxu0
        %635 = vmatprep.mubr.f32.mxu0 %v324
        %636 = vmatmul.mubr.f32.gmra.mrb[0].mxu0 %v323
        %v637 = vpop.f32.mrb[0].mxu0
        %v638 = vadd.f32 0.0, %v637
        %v639 = vpop.f32.mrb[0].mxu0
        %640 = vmatprep.mubr.f32.mxu0 %v326
        %641 = vmatmul.mubr.f32.gmra.mrb[0].mxu0 %v325
        %v642 = vpop.f32.mrb[0].mxu0
        %v643 = vadd.f32 0.0, %v642
        %v644 = vpop.f32.mrb[0].mxu0
        %645 = vdwg.mxu0
        %646 = vrot.lane.b32.xlu0 %v303, 32
        %v647 = vpop.permute.xlu0 %646
        %648 = vrot.lane.b32.xlu0 %v304, 32
        %v649 = vpop.permute.xlu0 %648
        %650 = vrot.lane.b32.xlu0 %v305, 32
        %v651 = vpop.permute.xlu0 %650
        %652 = vrot.lane.b32.xlu0 %v306, 32
        %v653 = vpop.permute.xlu0 %652
        %654 = vrot.lane.b32.xlu0 %v307, 32
        %v655 = vpop.permute.xlu0 %654
        %656 = vrot.lane.b32.xlu0 %v308, 32
        %v657 = vpop.permute.xlu0 %656
        %658 = vrot.lane.b32.xlu0 %v309, 32
        %v659 = vpop.permute.xlu0 %658
        %660 = vrot.lane.b32.xlu0 %v310, 32
        %v661 = vpop.permute.xlu0 %660
        %v670 = vsel %vm331, %v608, %v647
        %v671 = vsel %vm331, %v613, %v649
        %v672 = vsel %vm331, %v618, %v651
        %v673 = vsel %vm331, %v623, %v653
        %v674 = vsel %vm331, %v628, %v655
        %v675 = vsel %vm331, %v633, %v657
        %v676 = vsel %vm331, %v638, %v659
        %v677 = vsel %vm331, %v643, %v661
        %v678 = vld [vmem:[%s4] sm:$0xff]
        %v679 = vld [vmem:[%s4 + $0x8] sm:$0xff]
        %v680 = vld [vmem:[%s4 + $0x10] sm:$0xff]
        %v681 = vld [vmem:[%s4 + $0x18] sm:$0xff]
        %v682 = vld [vmem:[%s4 + $0x20] sm:$0xff]
        %v683 = vld [vmem:[%s4 + $0x28] sm:$0xff]
        %v684 = vld [vmem:[%s4 + $0x30] sm:$0xff]
        %v685 = vld [vmem:[%s4 + $0x38] sm:$0xff]
        %v686 = vld [vmem:[%s261] sm:$0xff]
        %v687 = vld [vmem:[%s261 + $0x8] sm:$0xff]
        %v688 = vld [vmem:[%s261 + $0x10] sm:$0xff]
        %v689 = vld [vmem:[%s261 + $0x18] sm:$0xff]
        %v690 = vld [vmem:[%s261 + $0x20] sm:$0xff]
        %v691 = vld [vmem:[%s261 + $0x28] sm:$0xff]
        %v692 = vld [vmem:[%s261 + $0x30] sm:$0xff]
        %v693 = vld [vmem:[%s261 + $0x38] sm:$0xff]
        %vm694 = vcmask 523264
        %v696 = vsel %vm694, %v670, 0
        %v699 = vsel %vm694, %v671, 0
        %v702 = vsel %vm694, %v672, 0
        %v705 = vsel %vm694, %v673, 0
        %v708 = vsel %vm694, %v674, 0
        %v711 = vsel %vm694, %v675, 0
        %v714 = vsel %vm694, %v676, 0
        %v717 = vsel %vm694, %v677, 0
        %719 = vmatprep.subr.mxu0 0.0
        %720 = vmatpush1.msra.mxu0 %v678
        %721 = vmatprep.subr.mxu0 0.0
        %722 = vmatpush1.msra.mxu0 %v679
        %723 = vmatprep.subr.mxu0 0.0
        %724 = vmatpush1.msra.mxu0 %v680
        %725 = vmatprep.subr.mxu0 0.0
        %726 = vmatpush1.msra.mxu0 %v681
        %727 = vmatprep.subr.mxu0 0.0
        %728 = vmatpush1.msra.mxu0 %v682
        %729 = vmatprep.subr.mxu0 0.0
        %730 = vmatpush1.msra.mxu0 %v683
        %731 = vmatprep.subr.mxu0 0.0
        %732 = vmatpush1.msra.mxu0 %v684
        %733 = vmatprep.subr.mxu0 0.0
        %734 = vmatpush1.msra.mxu0 %v685
        %735 = vmatprep.subr.mxu0 0.0
        %736 = vmatpush1.msra.mxu0 0.0
        %737 = vmatprep.subr.mxu0 0.0
        %738 = vmatpush1.msra.mxu0 0.0
        %739 = vmatprep.subr.mxu0 0.0
        %740 = vmatpush1.msra.mxu0 0.0
        %741 = vmatprep.subr.mxu0 0.0
        %742 = vmatpush1.msra.mxu0 0.0
        %743 = vmatprep.subr.mxu0 0.0
        %744 = vmatpush1.msra.mxu0 0.0
        %745 = vmatprep.subr.mxu0 0.0
        %746 = vmatpush1.msra.mxu0 0.0
        %747 = vmatprep.subr.mxu0 0.0
        %748 = vmatpush1.msra.mxu0 0.0
        %749 = vmatprep.subr.mxu0 0.0
        %750 = vmatpush1.msra.mxu0 0.0
        %751 = vmatprep.subr.mxu0 0.0
        %752 = vmatpush1.msra.mxu0 0.0
        %753 = vmatprep.subr.mxu0 0.0
        %754 = vmatpush1.msra.mxu0 0.0
        %755 = vmatprep.subr.mxu0 0.0
        %756 = vmatpush1.msra.mxu0 0.0
        %757 = vmatprep.subr.mxu0 0.0
        %758 = vmatpush1.msra.mxu0 0.0
        %759 = vmatprep.subr.mxu0 0.0
        %760 = vmatpush1.msra.mxu0 0.0
        %761 = vmatprep.subr.mxu0 0.0
        %762 = vmatpush1.msra.mxu0 0.0
        %763 = vmatprep.subr.mxu0 0.0
        %764 = vmatpush1.msra.mxu0 0.0
        %765 = vmatprep.subr.mxu0 0.0
        %766 = vmatpush1.msra.mxu0 0.0
        %767 = vmatprep.subr.mxu0 0.0
        %768 = vmatpush1.msra.mxu0 0.0
        %769 = vmatprep.subr.mxu0 0.0
        %770 = vmatpush1.msra.mxu0 0.0
        %771 = vmatprep.subr.mxu0 0.0
        %772 = vmatpush1.msra.mxu0 0.0
        %773 = vmatprep.subr.mxu0 0.0
        %774 = vmatpush1.msra.mxu0 0.0
        %775 = vmatprep.subr.mxu0 0.0
        %776 = vmatpush1.msra.mxu0 0.0
        %777 = vmatprep.subr.mxu0 0.0
        %778 = vmatpush1.msra.mxu0 0.0
        %779 = vmatprep.subr.mxu0 0.0
        %780 = vmatpush1.msra.mxu0 0.0
        %781 = vmatprep.subr.mxu0 0.0
        %782 = vmatpush1.msra.mxu0 0.0
        %783 = vmatprep.mubr.f32.mxu0 0.0
        %784 = vmatmul.mubr.f32.gmra.mrb[0].mxu0 %v696
        %v785 = vpop.f32.mrb[0].mxu0
        %v786 = vadd.f32 %v686, %v785
        %v787 = vpop.f32.mrb[0].mxu0
        %788 = vmatprep.mubr.f32.mxu0 0.0
        %789 = vmatmul.mubr.f32.gmra.mrb[0].mxu0 %v699
        %v790 = vpop.f32.mrb[0].mxu0
        %v791 = vadd.f32 %v687, %v790
        %v792 = vpop.f32.mrb[0].mxu0
        %793 = vmatprep.mubr.f32.mxu0 0.0
        %794 = vmatmul.mubr.f32.gmra.mrb[0].mxu0 %v702
        %v795 = vpop.f32.mrb[0].mxu0
        %v796 = vadd.f32 %v688, %v795
        %v797 = vpop.f32.mrb[0].mxu0
        %798 = vmatprep.mubr.f32.mxu0 0.0
        %799 = vmatmul.mubr.f32.gmra.mrb[0].mxu0 %v705
        %v800 = vpop.f32.mrb[0].mxu0
        %v801 = vadd.f32 %v689, %v800
        %v802 = vpop.f32.mrb[0].mxu0
        %803 = vmatprep.mubr.f32.mxu0 0.0
        %804 = vmatmul.mubr.f32.gmra.mrb[0].mxu0 %v708
        %v805 = vpop.f32.mrb[0].mxu0
        %v806 = vadd.f32 %v690, %v805
        %v807 = vpop.f32.mrb[0].mxu0
        %808 = vmatprep.mubr.f32.mxu0 0.0
        %809 = vmatmul.mubr.f32.gmra.mrb[0].mxu0 %v711
        %v810 = vpop.f32.mrb[0].mxu0
        %v811 = vadd.f32 %v691, %v810
        %v812 = vpop.f32.mrb[0].mxu0
        %813 = vmatprep.mubr.f32.mxu0 0.0
        %814 = vmatmul.mubr.f32.gmra.mrb[0].mxu0 %v714
        %v815 = vpop.f32.mrb[0].mxu0
        %v816 = vadd.f32 %v692, %v815
        %v817 = vpop.f32.mrb[0].mxu0
        %818 = vmatprep.mubr.f32.mxu0 0.0
        %819 = vmatmul.mubr.f32.gmra.mrb[0].mxu0 %v717
        %v820 = vpop.f32.mrb[0].mxu0
        %v821 = vadd.f32 %v693, %v820
        %v822 = vpop.f32.mrb[0].mxu0
        %823 = vdwg.mxu0
        %v824 = vxor.u32 %v786, 2147483648
        %v825 = vxor.u32 %v791, 2147483648
        %v826 = vxor.u32 %v796, 2147483648
        %v827 = vxor.u32 %v801, 2147483648
        %v828 = vxor.u32 %v806, 2147483648
        %v829 = vxor.u32 %v811, 2147483648
        %v830 = vxor.u32 %v816, 2147483648
        %v831 = vxor.u32 %v821, 2147483648
        %v832 = vmul.f32 %v824, 1.442695
        %v833 = vpow.pop %v832
        %v834 = vmul.f32 %v825, 1.442695
        %v835 = vpow.pop %v834
        %v836 = vmul.f32 %v826, 1.442695
        %v837 = vpow.pop %v836
        %v838 = vmul.f32 %v827, 1.442695
        %v839 = vpow.pop %v838
        %v840 = vmul.f32 %v828, 1.442695
        %v841 = vpow.pop %v840
        %v842 = vmul.f32 %v829, 1.442695
        %v843 = vpow.pop %v842
        %v844 = vmul.f32 %v830, 1.442695
        %v845 = vpow.pop %v844
        %v846 = vmul.f32 %v831, 1.442695
        %v847 = vpow.pop %v846
        %v848 = vadd.f32 %v833, 1.0
        %v849 = vadd.f32 %v835, 1.0
        %v850 = vadd.f32 %v837, 1.0
        %v851 = vadd.f32 %v839, 1.0
        %v852 = vadd.f32 %v841, 1.0
        %v853 = vadd.f32 %v843, 1.0
        %v854 = vadd.f32 %v845, 1.0
        %v855 = vadd.f32 %v847, 1.0
        %v856 = vrcp.pop %v848
        %v857 = vmul.f32 1.0, %v856
        %v858 = vrcp.pop %v849
        %v859 = vmul.f32 1.0, %v858
        %v860 = vrcp.pop %v850
        %v861 = vmul.f32 1.0, %v860
        %v862 = vrcp.pop %v851
        %v863 = vmul.f32 1.0, %v862
        %v864 = vrcp.pop %v852
        %v865 = vmul.f32 1.0, %v864
        %v866 = vrcp.pop %v853
        %v867 = vmul.f32 1.0, %v866
        %v868 = vrcp.pop %v854
        %v869 = vmul.f32 1.0, %v868
        %v870 = vrcp.pop %v855
        %v871 = vmul.f32 1.0, %v870
        %880 = vrot.lane.b32.xlu0 %v786, 32
        %v881 = vpop.permute.xlu0 %880
        %882 = vrot.lane.b32.xlu0 %v791, 32
        %v883 = vpop.permute.xlu0 %882
        %884 = vrot.lane.b32.xlu0 %v796, 32
        %v885 = vpop.permute.xlu0 %884
        %886 = vrot.lane.b32.xlu0 %v801, 32
        %v887 = vpop.permute.xlu0 %886
        %888 = vrot.lane.b32.xlu0 %v806, 32
        %v889 = vpop.permute.xlu0 %888
        %890 = vrot.lane.b32.xlu0 %v811, 32
        %v891 = vpop.permute.xlu0 %890
        %892 = vrot.lane.b32.xlu0 %v816, 32
        %v893 = vpop.permute.xlu0 %892
        %894 = vrot.lane.b32.xlu0 %v821, 32
        %v895 = vpop.permute.xlu0 %894
        %v904 = vmul.f32 %v857, %v881
        %v905 = vmul.f32 %v859, %v883
        %v906 = vmul.f32 %v861, %v885
        %v907 = vmul.f32 %v863, %v887
        %v908 = vmul.f32 %v865, %v889
        %v909 = vmul.f32 %v867, %v891
        %v910 = vmul.f32 %v869, %v893
        %v911 = vmul.f32 %v871, %v895
        %920 = vrot.lane.b32.xlu0 %v904, 64
        %v921 = vpop.permute.xlu0 %920
        %922 = vrot.lane.b32.xlu0 %v905, 64
        %v923 = vpop.permute.xlu0 %922
        %924 = vrot.lane.b32.xlu0 %v906, 64
        %v925 = vpop.permute.xlu0 %924
        %926 = vrot.lane.b32.xlu0 %v907, 64
        %v927 = vpop.permute.xlu0 %926
        %928 = vrot.lane.b32.xlu0 %v908, 64
        %v929 = vpop.permute.xlu0 %928
        %930 = vrot.lane.b32.xlu0 %v909, 64
        %v931 = vpop.permute.xlu0 %930
        %932 = vrot.lane.b32.xlu0 %v910, 64
        %v933 = vpop.permute.xlu0 %932
        %934 = vrot.lane.b32.xlu0 %v911, 64
        %v935 = vpop.permute.xlu0 %934
        %v944 = vadd.f32 %v786, %v921
        %v945 = vadd.f32 %v791, %v923
        %v946 = vadd.f32 %v796, %v925
        %v947 = vadd.f32 %v801, %v927
        %v948 = vadd.f32 %v806, %v929
        %v949 = vadd.f32 %v811, %v931
        %v950 = vadd.f32 %v816, %v933
        %v951 = vadd.f32 %v821, %v935
        %v952 = vtanh.pop %v944
        %v953 = vtanh.pop %v945
        %v954 = vtanh.pop %v946
        %v955 = vtanh.pop %v947
        %v956 = vtanh.pop %v948
        %v957 = vtanh.pop %v949
        %v958 = vtanh.pop %v950
        %v959 = vtanh.pop %v951
        %968 = vrot.lane.b32.xlu0 %v952, 64
        %v969 = vpop.permute.xlu0 %968
        %970 = vrot.lane.b32.xlu0 %v953, 64
        %v971 = vpop.permute.xlu0 %970
        %972 = vrot.lane.b32.xlu0 %v954, 64
        %v973 = vpop.permute.xlu0 %972
        %974 = vrot.lane.b32.xlu0 %v955, 64
        %v975 = vpop.permute.xlu0 %974
        %976 = vrot.lane.b32.xlu0 %v956, 64
        %v977 = vpop.permute.xlu0 %976
        %978 = vrot.lane.b32.xlu0 %v957, 64
        %v979 = vpop.permute.xlu0 %978
        %980 = vrot.lane.b32.xlu0 %v958, 64
        %v981 = vpop.permute.xlu0 %980
        %982 = vrot.lane.b32.xlu0 %v959, 64
        %v983 = vpop.permute.xlu0 %982
        %v992 = vsub.f32 %v303, %v969
        %v993 = vsub.f32 %v304, %v971
        %v994 = vsub.f32 %v305, %v973
        %v995 = vsub.f32 %v306, %v975
        %v996 = vsub.f32 %v307, %v977
        %v997 = vsub.f32 %v308, %v979
        %v998 = vsub.f32 %v309, %v981
        %v999 = vsub.f32 %v310, %v983
        %1008 = vrot.lane.b32.xlu0 %v992, 32
        %v1009 = vpop.permute.xlu0 %1008
        %1010 = vrot.lane.b32.xlu0 %v993, 32
        %v1011 = vpop.permute.xlu0 %1010
        %1012 = vrot.lane.b32.xlu0 %v994, 32
        %v1013 = vpop.permute.xlu0 %1012
        %1014 = vrot.lane.b32.xlu0 %v995, 32
        %v1015 = vpop.permute.xlu0 %1014
        %1016 = vrot.lane.b32.xlu0 %v996, 32
        %v1017 = vpop.permute.xlu0 %1016
        %1018 = vrot.lane.b32.xlu0 %v997, 32
        %v1019 = vpop.permute.xlu0 %1018
        %1020 = vrot.lane.b32.xlu0 %v998, 32
        %v1021 = vpop.permute.xlu0 %1020
        %1022 = vrot.lane.b32.xlu0 %v999, 32
        %v1023 = vpop.permute.xlu0 %1022
        %v1032 = vmul.f32 %v857, %v1009
        %v1033 = vmul.f32 %v859, %v1011
        %v1034 = vmul.f32 %v861, %v1013
        %v1035 = vmul.f32 %v863, %v1015
        %v1036 = vmul.f32 %v865, %v1017
        %v1037 = vmul.f32 %v867, %v1019
        %v1038 = vmul.f32 %v869, %v1021
        %v1039 = vmul.f32 %v871, %v1023
        %1048 = vrot.lane.b32.xlu0 %v1032, 32
        %v1049 = vpop.permute.xlu0 %1048
        %1050 = vrot.lane.b32.xlu0 %v1033, 32
        %v1051 = vpop.permute.xlu0 %1050
        %1052 = vrot.lane.b32.xlu0 %v1034, 32
        %v1053 = vpop.permute.xlu0 %1052
        %1054 = vrot.lane.b32.xlu0 %v1035, 32
        %v1055 = vpop.permute.xlu0 %1054
        %1056 = vrot.lane.b32.xlu0 %v1036, 32
        %v1057 = vpop.permute.xlu0 %1056
        %1058 = vrot.lane.b32.xlu0 %v1037, 32
        %v1059 = vpop.permute.xlu0 %1058
        %1060 = vrot.lane.b32.xlu0 %v1038, 32
        %v1061 = vpop.permute.xlu0 %1060
        %1062 = vrot.lane.b32.xlu0 %v1039, 32
        %v1063 = vpop.permute.xlu0 %1062
        %v1072 = vadd.f32 %v952, %v1049
        %v1073 = vadd.f32 %v953, %v1051
        %v1074 = vadd.f32 %v954, %v1053
        %v1075 = vadd.f32 %v955, %v1055
        %v1076 = vadd.f32 %v956, %v1057
        %v1077 = vadd.f32 %v957, %v1059
        %v1078 = vadd.f32 %v958, %v1061
        %v1079 = vadd.f32 %v959, %v1063
        %s1080 = scalar_lea.vmem %s3, 32
        %v1081 = vld [vmem:[%s1080] sm:$0xff]
        %v1082 = vld [vmem:[%s1080 + $0x8] sm:$0xff]
        %v1083 = vld [vmem:[%s1080 + $0x10] sm:$0xff]
        %v1084 = vld [vmem:[%s1080 + $0x18] sm:$0xff]
        %1093 = vrot.lane.b32.xlu0 %v1072, 64
        %v1094 = vpop.permute.xlu0 %1093
        %1095 = vrot.lane.b32.xlu0 %v1073, 64
        %v1096 = vpop.permute.xlu0 %1095
        %1097 = vrot.lane.b32.xlu0 %v1074, 64
        %v1098 = vpop.permute.xlu0 %1097
        %1099 = vrot.lane.b32.xlu0 %v1075, 64
        %v1100 = vpop.permute.xlu0 %1099
        %1101 = vrot.lane.b32.xlu0 %v1076, 64
        %v1102 = vpop.permute.xlu0 %1101
        %1103 = vrot.lane.b32.xlu0 %v1077, 64
        %v1104 = vpop.permute.xlu0 %1103
        %1105 = vrot.lane.b32.xlu0 %v1078, 64
        %v1106 = vpop.permute.xlu0 %1105
        %1107 = vrot.lane.b32.xlu0 %v1079, 64
        %v1108 = vpop.permute.xlu0 %1107
        %v1109 = vsel %vm331, %v1094, 0
        %v1111 = vsel %vm331, %v1096, 0
        %v1113 = vsel %vm331, %v1098, 0
        %v1115 = vsel %vm331, %v1100, 0
        %v1117 = vsel %vm331, %v1102, 0
        %v1119 = vsel %vm331, %v1104, 0
        %v1121 = vsel %vm331, %v1106, 0
        %v1123 = vsel %vm331, %v1108, 0
        %1125 = vmatprep.subr.mxu0 0.0
        %1126 = vmatpush1.msra.mxu0 %v1081
        %1127 = vmatprep.subr.mxu0 0.0
        %1128 = vmatpush1.msra.mxu0 %v1082
        %1129 = vmatprep.subr.mxu0 0.0
        %1130 = vmatpush1.msra.mxu0 %v1083
        %1131 = vmatprep.subr.mxu0 0.0
        %1132 = vmatpush1.msra.mxu0 %v1084
        %1133 = vmatprep.subr.mxu0 0.0
        %1134 = vmatpush1.msra.mxu0 0.0
        %1135 = vmatprep.subr.mxu0 0.0
        %1136 = vmatpush1.msra.mxu0 0.0
        %1137 = vmatprep.subr.mxu0 0.0
        %1138 = vmatpush1.msra.mxu0 0.0
        %1139 = vmatprep.subr.mxu0 0.0
        %1140 = vmatpush1.msra.mxu0 0.0
        %1141 = vmatprep.subr.mxu0 0.0
        %1142 = vmatpush1.msra.mxu0 0.0
        %1143 = vmatprep.subr.mxu0 0.0
        %1144 = vmatpush1.msra.mxu0 0.0
        %1145 = vmatprep.subr.mxu0 0.0
        %1146 = vmatpush1.msra.mxu0 0.0
        %1147 = vmatprep.subr.mxu0 0.0
        %1148 = vmatpush1.msra.mxu0 0.0
        %1149 = vmatprep.subr.mxu0 0.0
        %1150 = vmatpush1.msra.mxu0 0.0
        %1151 = vmatprep.subr.mxu0 0.0
        %1152 = vmatpush1.msra.mxu0 0.0
        %1153 = vmatprep.subr.mxu0 0.0
        %1154 = vmatpush1.msra.mxu0 0.0
        %1155 = vmatprep.subr.mxu0 0.0
        %1156 = vmatpush1.msra.mxu0 0.0
        %1157 = vmatprep.subr.mxu0 0.0
        %1158 = vmatpush1.msra.mxu0 0.0
        %1159 = vmatprep.subr.mxu0 0.0
        %1160 = vmatpush1.msra.mxu0 0.0
        %1161 = vmatprep.subr.mxu0 0.0
        %1162 = vmatpush1.msra.mxu0 0.0
        %1163 = vmatprep.subr.mxu0 0.0
        %1164 = vmatpush1.msra.mxu0 0.0
        %1165 = vmatprep.subr.mxu0 0.0
        %1166 = vmatpush1.msra.mxu0 0.0
        %1167 = vmatprep.subr.mxu0 0.0
        %1168 = vmatpush1.msra.mxu0 0.0
        %1169 = vmatprep.subr.mxu0 0.0
        %1170 = vmatpush1.msra.mxu0 0.0
        %1171 = vmatprep.subr.mxu0 0.0
        %1172 = vmatpush1.msra.mxu0 0.0
        %1173 = vmatprep.subr.mxu0 0.0
        %1174 = vmatpush1.msra.mxu0 0.0
        %1175 = vmatprep.subr.mxu0 0.0
        %1176 = vmatpush1.msra.mxu0 0.0
        %1177 = vmatprep.subr.mxu0 0.0
        %1178 = vmatpush1.msra.mxu0 0.0
        %1179 = vmatprep.subr.mxu0 0.0
        %1180 = vmatpush1.msra.mxu0 0.0
        %1181 = vmatprep.subr.mxu0 0.0
        %1182 = vmatpush1.msra.mxu0 0.0
        %1183 = vmatprep.subr.mxu0 0.0
        %1184 = vmatpush1.msra.mxu0 0.0
        %1185 = vmatprep.subr.mxu0 0.0
        %1186 = vmatpush1.msra.mxu0 0.0
        %1187 = vmatprep.subr.mxu0 0.0
        %1188 = vmatpush1.msra.mxu0 0.0
        %1189 = vmatprep.mubr.f32.mxu0 0.0
        %1190 = vmatmul.mubr.f32.gmra.mrb[0].mxu0 %v1109
        %v1191 = vpop.f32.mrb[0].mxu0
        %v1192 = vadd.f32 0.0, %v1191
        %v1193 = vpop.f32.mrb[0].mxu0
        %1194 = vmatprep.mubr.f32.mxu0 0.0
        %1195 = vmatmul.mubr.f32.gmra.mrb[0].mxu0 %v1111
        %v1196 = vpop.f32.mrb[0].mxu0
        %v1197 = vadd.f32 0.0, %v1196
        %v1198 = vpop.f32.mrb[0].mxu0
        %1199 = vmatprep.mubr.f32.mxu0 0.0
        %1200 = vmatmul.mubr.f32.gmra.mrb[0].mxu0 %v1113
        %v1201 = vpop.f32.mrb[0].mxu0
        %v1202 = vadd.f32 0.0, %v1201
        %v1203 = vpop.f32.mrb[0].mxu0
        %1204 = vmatprep.mubr.f32.mxu0 0.0
        %1205 = vmatmul.mubr.f32.gmra.mrb[0].mxu0 %v1115
        %v1206 = vpop.f32.mrb[0].mxu0
        %v1207 = vadd.f32 0.0, %v1206
        %v1208 = vpop.f32.mrb[0].mxu0
        %1209 = vmatprep.mubr.f32.mxu0 0.0
        %1210 = vmatmul.mubr.f32.gmra.mrb[0].mxu0 %v1117
        %v1211 = vpop.f32.mrb[0].mxu0
        %v1212 = vadd.f32 0.0, %v1211
        %v1213 = vpop.f32.mrb[0].mxu0
        %1214 = vmatprep.mubr.f32.mxu0 0.0
        %1215 = vmatmul.mubr.f32.gmra.mrb[0].mxu0 %v1119
        %v1216 = vpop.f32.mrb[0].mxu0
        %v1217 = vadd.f32 0.0, %v1216
        %v1218 = vpop.f32.mrb[0].mxu0
        %1219 = vmatprep.mubr.f32.mxu0 0.0
        %1220 = vmatmul.mubr.f32.gmra.mrb[0].mxu0 %v1121
        %v1221 = vpop.f32.mrb[0].mxu0
        %v1222 = vadd.f32 0.0, %v1221
        %v1223 = vpop.f32.mrb[0].mxu0
        %1224 = vmatprep.mubr.f32.mxu0 0.0
        %1225 = vmatmul.mubr.f32.gmra.mrb[0].mxu0 %v1123
        %v1226 = vpop.f32.mrb[0].mxu0
        %v1227 = vadd.f32 0.0, %v1226
        %v1228 = vpop.f32.mrb[0].mxu0
        %1229 = vdwg.mxu0
        %1238 = vrot.lane.b32.xlu0 %v1192, 96
        %v1239 = vpop.permute.xlu0 %1238
        %1240 = vrot.lane.b32.xlu0 %v1197, 96
        %v1241 = vpop.permute.xlu0 %1240
        %1242 = vrot.lane.b32.xlu0 %v1202, 96
        %v1243 = vpop.permute.xlu0 %1242
        %1244 = vrot.lane.b32.xlu0 %v1207, 96
        %v1245 = vpop.permute.xlu0 %1244
        %1246 = vrot.lane.b32.xlu0 %v1212, 96
        %v1247 = vpop.permute.xlu0 %1246
        %1248 = vrot.lane.b32.xlu0 %v1217, 96
        %v1249 = vpop.permute.xlu0 %1248
        %1250 = vrot.lane.b32.xlu0 %v1222, 96
        %v1251 = vpop.permute.xlu0 %1250
        %1252 = vrot.lane.b32.xlu0 %v1227, 96
        %v1253 = vpop.permute.xlu0 %1252
        %1262 = vrot.lane.b32.xlu0 %v1192, 64
        %v1263 = vpop.permute.xlu0 %1262
        %1264 = vrot.lane.b32.xlu0 %v1197, 64
        %v1265 = vpop.permute.xlu0 %1264
        %1266 = vrot.lane.b32.xlu0 %v1202, 64
        %v1267 = vpop.permute.xlu0 %1266
        %1268 = vrot.lane.b32.xlu0 %v1207, 64
        %v1269 = vpop.permute.xlu0 %1268
        %1270 = vrot.lane.b32.xlu0 %v1212, 64
        %v1271 = vpop.permute.xlu0 %1270
        %1272 = vrot.lane.b32.xlu0 %v1217, 64
        %v1273 = vpop.permute.xlu0 %1272
        %1274 = vrot.lane.b32.xlu0 %v1222, 64
        %v1275 = vpop.permute.xlu0 %1274
        %1276 = vrot.lane.b32.xlu0 %v1227, 64
        %v1277 = vpop.permute.xlu0 %1276
        %1286 = vrot.lane.b32.xlu0 %v1192, 32
        %v1287 = vpop.permute.xlu0 %1286
        %1288 = vrot.lane.b32.xlu0 %v1197, 32
        %v1289 = vpop.permute.xlu0 %1288
        %1290 = vrot.lane.b32.xlu0 %v1202, 32
        %v1291 = vpop.permute.xlu0 %1290
        %1292 = vrot.lane.b32.xlu0 %v1207, 32
        %v1293 = vpop.permute.xlu0 %1292
        %1294 = vrot.lane.b32.xlu0 %v1212, 32
        %v1295 = vpop.permute.xlu0 %1294
        %1296 = vrot.lane.b32.xlu0 %v1217, 32
        %v1297 = vpop.permute.xlu0 %1296
        %1298 = vrot.lane.b32.xlu0 %v1222, 32
        %v1299 = vpop.permute.xlu0 %1298
        %1300 = vrot.lane.b32.xlu0 %v1227, 32
        %v1301 = vpop.permute.xlu0 %1300
        %1310 = vmatprep.subr.mxu0 0.0
        %1311 = vmatpush1.msra.mxu0 %v1192
        %1312 = vmatprep.subr.mxu0 0.0
        %1313 = vmatpush1.msra.mxu0 %v1197
        %1314 = vmatprep.subr.mxu0 0.0
        %1315 = vmatpush1.msra.mxu0 %v1202
        %1316 = vmatprep.subr.mxu0 0.0
        %1317 = vmatpush1.msra.mxu0 %v1207
        %1318 = vmatprep.subr.mxu0 0.0
        %1319 = vmatpush1.msra.mxu0 %v1212
        %1320 = vmatprep.subr.mxu0 0.0
        %1321 = vmatpush1.msra.mxu0 %v1217
        %1322 = vmatprep.subr.mxu0 0.0
        %1323 = vmatpush1.msra.mxu0 %v1222
        %1324 = vmatprep.subr.mxu0 0.0
        %1325 = vmatpush1.msra.mxu0 %v1227
        %1326 = vmatprep.subr.mxu0 0.0
        %1327 = vmatpush1.msra.mxu0 %v1239
        %1328 = vmatprep.subr.mxu0 0.0
        %1329 = vmatpush1.msra.mxu0 %v1241
        %1330 = vmatprep.subr.mxu0 0.0
        %1331 = vmatpush1.msra.mxu0 %v1243
        %1332 = vmatprep.subr.mxu0 0.0
        %1333 = vmatpush1.msra.mxu0 %v1245
        %1334 = vmatprep.subr.mxu0 0.0
        %1335 = vmatpush1.msra.mxu0 %v1247
        %1336 = vmatprep.subr.mxu0 0.0
        %1337 = vmatpush1.msra.mxu0 %v1249
        %1338 = vmatprep.subr.mxu0 0.0
        %1339 = vmatpush1.msra.mxu0 %v1251
        %1340 = vmatprep.subr.mxu0 0.0
        %1341 = vmatpush1.msra.mxu0 %v1253
        %1342 = vmatprep.subr.mxu0 0.0
        %1343 = vmatpush1.msra.mxu0 %v1263
        %1344 = vmatprep.subr.mxu0 0.0
        %1345 = vmatpush1.msra.mxu0 %v1265
        %1346 = vmatprep.subr.mxu0 0.0
        %1347 = vmatpush1.msra.mxu0 %v1267
        %1348 = vmatprep.subr.mxu0 0.0
        %1349 = vmatpush1.msra.mxu0 %v1269
        %1350 = vmatprep.subr.mxu0 0.0
        %1351 = vmatpush1.msra.mxu0 %v1271
        %1352 = vmatprep.subr.mxu0 0.0
        %1353 = vmatpush1.msra.mxu0 %v1273
        %1354 = vmatprep.subr.mxu0 0.0
        %1355 = vmatpush1.msra.mxu0 %v1275
        %1356 = vmatprep.subr.mxu0 0.0
        %1357 = vmatpush1.msra.mxu0 %v1277
        %1358 = vmatprep.subr.mxu0 0.0
        %1359 = vmatpush1.msra.mxu0 %v1287
        %1360 = vmatprep.subr.mxu0 0.0
        %1361 = vmatpush1.msra.mxu0 %v1289
        %1362 = vmatprep.subr.mxu0 0.0
        %1363 = vmatpush1.msra.mxu0 %v1291
        %1364 = vmatprep.subr.mxu0 0.0
        %1365 = vmatpush1.msra.mxu0 %v1293
        %1366 = vmatprep.subr.mxu0 0.0
        %1367 = vmatpush1.msra.mxu0 %v1295
        %1368 = vmatprep.subr.mxu0 0.0
        %1369 = vmatpush1.msra.mxu0 %v1297
        %1370 = vmatprep.subr.mxu0 0.0
        %1371 = vmatpush1.msra.mxu0 %v1299
        %1372 = vmatprep.subr.mxu0 0.0
        %1373 = vmatpush1.msra.mxu0 %v1301
        %1374 = vmatprep.mubr.f32.mxu0 %v312
        %1375 = vmatmul.mubr.f32.gmra.mrb[0].mxu0 %v311
        %v1376 = vpop.f32.mrb[0].mxu0
        %v1377 = vadd.f32 0.0, %v1376
        %v1378 = vpop.f32.mrb[0].mxu0
        %1379 = vmatprep.mubr.f32.mxu0 %v314
        %1380 = vmatmul.mubr.f32.gmra.mrb[0].mxu0 %v313
        %v1381 = vpop.f32.mrb[0].mxu0
        %v1382 = vadd.f32 0.0, %v1381
        %v1383 = vpop.f32.mrb[0].mxu0
        %1384 = vmatprep.mubr.f32.mxu0 %v316
        %1385 = vmatmul.mubr.f32.gmra.mrb[0].mxu0 %v315
        %v1386 = vpop.f32.mrb[0].mxu0
        %v1387 = vadd.f32 0.0, %v1386
        %v1388 = vpop.f32.mrb[0].mxu0
        %1389 = vmatprep.mubr.f32.mxu0 %v318
        %1390 = vmatmul.mubr.f32.gmra.mrb[0].mxu0 %v317
        %v1391 = vpop.f32.mrb[0].mxu0
        %v1392 = vadd.f32 0.0, %v1391
        %v1393 = vpop.f32.mrb[0].mxu0
        %1394 = vmatprep.mubr.f32.mxu0 %v320
        %1395 = vmatmul.mubr.f32.gmra.mrb[0].mxu0 %v319
        %v1396 = vpop.f32.mrb[0].mxu0
        %v1397 = vadd.f32 0.0, %v1396
        %v1398 = vpop.f32.mrb[0].mxu0
        %1399 = vmatprep.mubr.f32.mxu0 %v322
        %1400 = vmatmul.mubr.f32.gmra.mrb[0].mxu0 %v321
        %v1401 = vpop.f32.mrb[0].mxu0
        %v1402 = vadd.f32 0.0, %v1401
        %v1403 = vpop.f32.mrb[0].mxu0
        %1404 = vmatprep.mubr.f32.mxu0 %v324
        %1405 = vmatmul.mubr.f32.gmra.mrb[0].mxu0 %v323
        %v1406 = vpop.f32.mrb[0].mxu0
        %v1407 = vadd.f32 0.0, %v1406
        %v1408 = vpop.f32.mrb[0].mxu0
        %1409 = vmatprep.mubr.f32.mxu0 %v326
        %1410 = vmatmul.mubr.f32.gmra.mrb[0].mxu0 %v325
        %v1411 = vpop.f32.mrb[0].mxu0
        %v1412 = vadd.f32 0.0, %v1411
        %v1413 = vpop.f32.mrb[0].mxu0
        %1414 = vdwg.mxu0
        %1415 = vrot.lane.b32.xlu0 %v1072, 96
        %v1416 = vpop.permute.xlu0 %1415
        %1417 = vrot.lane.b32.xlu0 %v1073, 96
        %v1418 = vpop.permute.xlu0 %1417
        %1419 = vrot.lane.b32.xlu0 %v1074, 96
        %v1420 = vpop.permute.xlu0 %1419
        %1421 = vrot.lane.b32.xlu0 %v1075, 96
        %v1422 = vpop.permute.xlu0 %1421
        %1423 = vrot.lane.b32.xlu0 %v1076, 96
        %v1424 = vpop.permute.xlu0 %1423
        %1425 = vrot.lane.b32.xlu0 %v1077, 96
        %v1426 = vpop.permute.xlu0 %1425
        %1427 = vrot.lane.b32.xlu0 %v1078, 96
        %v1428 = vpop.permute.xlu0 %1427
        %1429 = vrot.lane.b32.xlu0 %v1079, 96
        %v1430 = vpop.permute.xlu0 %1429
        %v1439 = vsel %vm331, %v1377, %v1416
        %v1440 = vsel %vm331, %v1382, %v1418
        %v1441 = vsel %vm331, %v1387, %v1420
        %v1442 = vsel %vm331, %v1392, %v1422
        %v1443 = vsel %vm331, %v1397, %v1424
        %v1444 = vsel %vm331, %v1402, %v1426
        %v1445 = vsel %vm331, %v1407, %v1428
        %v1446 = vsel %vm331, %v1412, %v1430
        %s1447 = scalar_lea.vmem %s4, 64
        %v1448 = vld [vmem:[%s1447] sm:$0xff]
        %v1449 = vld [vmem:[%s1447 + $0x8] sm:$0xff]
        %v1450 = vld [vmem:[%s1447 + $0x10] sm:$0xff]
        %v1451 = vld [vmem:[%s1447 + $0x18] sm:$0xff]
        %v1452 = vld [vmem:[%s1447 + $0x20] sm:$0xff]
        %v1453 = vld [vmem:[%s1447 + $0x28] sm:$0xff]
        %v1454 = vld [vmem:[%s1447 + $0x30] sm:$0xff]
        %v1455 = vld [vmem:[%s1447 + $0x38] sm:$0xff]
        %s1456 = scalar_lea.vmem %s261, 64 [#allocation5]
        %v1457 = vld [vmem:[%s1456] sm:$0xff]
        %v1458 = vld [vmem:[%s1456 + $0x8] sm:$0xff]
        %v1459 = vld [vmem:[%s1456 + $0x10] sm:$0xff]
        %v1460 = vld [vmem:[%s1456 + $0x18] sm:$0xff]
        %v1461 = vld [vmem:[%s1456 + $0x20] sm:$0xff]
        %v1462 = vld [vmem:[%s1456 + $0x28] sm:$0xff]
        %v1463 = vld [vmem:[%s1456 + $0x30] sm:$0xff]
        %v1464 = vld [vmem:[%s1456 + $0x38] sm:$0xff]
        %v1466 = vsel %vm694, %v1439, 0
        %v1469 = vsel %vm694, %v1440, 0
        %v1472 = vsel %vm694, %v1441, 0
        %v1475 = vsel %vm694, %v1442, 0
        %v1478 = vsel %vm694, %v1443, 0
        %v1481 = vsel %vm694, %v1444, 0
        %v1484 = vsel %vm694, %v1445, 0
        %v1487 = vsel %vm694, %v1446, 0
        %1489 = vmatprep.subr.mxu0 0.0
        %1490 = vmatpush1.msra.mxu0 %v1448
        %1491 = vmatprep.subr.mxu0 0.0
        %1492 = vmatpush1.msra.mxu0 %v1449
        %1493 = vmatprep.subr.mxu0 0.0
        %1494 = vmatpush1.msra.mxu0 %v1450
        %1495 = vmatprep.subr.mxu0 0.0
        %1496 = vmatpush1.msra.mxu0 %v1451
        %1497 = vmatprep.subr.mxu0 0.0
        %1498 = vmatpush1.msra.mxu0 %v1452
        %1499 = vmatprep.subr.mxu0 0.0
        %1500 = vmatpush1.msra.mxu0 %v1453
        %1501 = vmatprep.subr.mxu0 0.0
        %1502 = vmatpush1.msra.mxu0 %v1454
        %1503 = vmatprep.subr.mxu0 0.0
        %1504 = vmatpush1.msra.mxu0 %v1455
        %1505 = vmatprep.subr.mxu0 0.0
        %1506 = vmatpush1.msra.mxu0 0.0
        %1507 = vmatprep.subr.mxu0 0.0
        %1508 = vmatpush1.msra.mxu0 0.0
        %1509 = vmatprep.subr.mxu0 0.0
        %1510 = vmatpush1.msra.mxu0 0.0
        %1511 = vmatprep.subr.mxu0 0.0
        %1512 = vmatpush1.msra.mxu0 0.0
        %1513 = vmatprep.subr.mxu0 0.0
        %1514 = vmatpush1.msra.mxu0 0.0
        %1515 = vmatprep.subr.mxu0 0.0
        %1516 = vmatpush1.msra.mxu0 0.0
        %1517 = vmatprep.subr.mxu0 0.0
        %1518 = vmatpush1.msra.mxu0 0.0
        %1519 = vmatprep.subr.mxu0 0.0
        %1520 = vmatpush1.msra.mxu0 0.0
        %1521 = vmatprep.subr.mxu0 0.0
        %1522 = vmatpush1.msra.mxu0 0.0
        %1523 = vmatprep.subr.mxu0 0.0
        %1524 = vmatpush1.msra.mxu0 0.0
        %1525 = vmatprep.subr.mxu0 0.0
        %1526 = vmatpush1.msra.mxu0 0.0
        %1527 = vmatprep.subr.mxu0 0.0
        %1528 = vmatpush1.msra.mxu0 0.0
        %1529 = vmatprep.subr.mxu0 0.0
        %1530 = vmatpush1.msra.mxu0 0.0
        %1531 = vmatprep.subr.mxu0 0.0
        %1532 = vmatpush1.msra.mxu0 0.0
        %1533 = vmatprep.subr.mxu0 0.0
        %1534 = vmatpush1.msra.mxu0 0.0
        %1535 = vmatprep.subr.mxu0 0.0
        %1536 = vmatpush1.msra.mxu0 0.0
        %1537 = vmatprep.subr.mxu0 0.0
        %1538 = vmatpush1.msra.mxu0 0.0
        %1539 = vmatprep.subr.mxu0 0.0
        %1540 = vmatpush1.msra.mxu0 0.0
        %1541 = vmatprep.subr.mxu0 0.0
        %1542 = vmatpush1.msra.mxu0 0.0
        %1543 = vmatprep.subr.mxu0 0.0
        %1544 = vmatpush1.msra.mxu0 0.0
        %1545 = vmatprep.subr.mxu0 0.0
        %1546 = vmatpush1.msra.mxu0 0.0
        %1547 = vmatprep.subr.mxu0 0.0
        %1548 = vmatpush1.msra.mxu0 0.0
        %1549 = vmatprep.subr.mxu0 0.0
        %1550 = vmatpush1.msra.mxu0 0.0
        %1551 = vmatprep.subr.mxu0 0.0
        %1552 = vmatpush1.msra.mxu0 0.0
        %1553 = vmatprep.mubr.f32.mxu0 0.0
        %1554 = vmatmul.mubr.f32.gmra.mrb[0].mxu0 %v1466
        %v1555 = vpop.f32.mrb[0].mxu0
        %v1556 = vadd.f32 %v1457, %v1555
        %v1557 = vpop.f32.mrb[0].mxu0
        %1558 = vmatprep.mubr.f32.mxu0 0.0
        %1559 = vmatmul.mubr.f32.gmra.mrb[0].mxu0 %v1469
        %v1560 = vpop.f32.mrb[0].mxu0
        %v1561 = vadd.f32 %v1458, %v1560
        %v1562 = vpop.f32.mrb[0].mxu0
        %1563 = vmatprep.mubr.f32.mxu0 0.0
        %1564 = vmatmul.mubr.f32.gmra.mrb[0].mxu0 %v1472
        %v1565 = vpop.f32.mrb[0].mxu0
        %v1566 = vadd.f32 %v1459, %v1565
        %v1567 = vpop.f32.mrb[0].mxu0
        %1568 = vmatprep.mubr.f32.mxu0 0.0
        %1569 = vmatmul.mubr.f32.gmra.mrb[0].mxu0 %v1475
        %v1570 = vpop.f32.mrb[0].mxu0
        %v1571 = vadd.f32 %v1460, %v1570
        %v1572 = vpop.f32.mrb[0].mxu0
        %1573 = vmatprep.mubr.f32.mxu0 0.0
        %1574 = vmatmul.mubr.f32.gmra.mrb[0].mxu0 %v1478
        %v1575 = vpop.f32.mrb[0].mxu0
        %v1576 = vadd.f32 %v1461, %v1575
        %v1577 = vpop.f32.mrb[0].mxu0
        %1578 = vmatprep.mubr.f32.mxu0 0.0
        %1579 = vmatmul.mubr.f32.gmra.mrb[0].mxu0 %v1481
        %v1580 = vpop.f32.mrb[0].mxu0
        %v1581 = vadd.f32 %v1462, %v1580
        %v1582 = vpop.f32.mrb[0].mxu0
        %1583 = vmatprep.mubr.f32.mxu0 0.0
        %1584 = vmatmul.mubr.f32.gmra.mrb[0].mxu0 %v1484
        %v1585 = vpop.f32.mrb[0].mxu0
        %v1586 = vadd.f32 %v1463, %v1585
        %v1587 = vpop.f32.mrb[0].mxu0
        %1588 = vmatprep.mubr.f32.mxu0 0.0
        %1589 = vmatmul.mubr.f32.gmra.mrb[0].mxu0 %v1487
        %v1590 = vpop.f32.mrb[0].mxu0
        %v1591 = vadd.f32 %v1464, %v1590
        %v1592 = vpop.f32.mrb[0].mxu0
        %1593 = vdwg.mxu0
        %v1594 = vxor.u32 %v1556, 2147483648
        %v1595 = vxor.u32 %v1561, 2147483648
        %v1596 = vxor.u32 %v1566, 2147483648
        %v1597 = vxor.u32 %v1571, 2147483648
        %v1598 = vxor.u32 %v1576, 2147483648
        %v1599 = vxor.u32 %v1581, 2147483648
        %v1600 = vxor.u32 %v1586, 2147483648
        %v1601 = vxor.u32 %v1591, 2147483648
        %v1602 = vmul.f32 %v1594, 1.442695
        %v1603 = vpow.pop %v1602
        %v1604 = vmul.f32 %v1595, 1.442695
        %v1605 = vpow.pop %v1604
        %v1606 = vmul.f32 %v1596, 1.442695
        %v1607 = vpow.pop %v1606
        %v1608 = vmul.f32 %v1597, 1.442695
        %v1609 = vpow.pop %v1608
        %v1610 = vmul.f32 %v1598, 1.442695
        %v1611 = vpow.pop %v1610
        %v1612 = vmul.f32 %v1599, 1.442695
        %v1613 = vpow.pop %v1612
        %v1614 = vmul.f32 %v1600, 1.442695
        %v1615 = vpow.pop %v1614
        %v1616 = vmul.f32 %v1601, 1.442695
        %v1617 = vpow.pop %v1616
        %v1618 = vadd.f32 %v1603, 1.0
        %v1619 = vadd.f32 %v1605, 1.0
        %v1620 = vadd.f32 %v1607, 1.0
        %v1621 = vadd.f32 %v1609, 1.0
        %v1622 = vadd.f32 %v1611, 1.0
        %v1623 = vadd.f32 %v1613, 1.0
        %v1624 = vadd.f32 %v1615, 1.0
        %v1625 = vadd.f32 %v1617, 1.0
        %v1626 = vrcp.pop %v1618
        %v1627 = vmul.f32 1.0, %v1626
        %v1628 = vrcp.pop %v1619
        %v1629 = vmul.f32 1.0, %v1628
        %v1630 = vrcp.pop %v1620
        %v1631 = vmul.f32 1.0, %v1630
        %v1632 = vrcp.pop %v1621
        %v1633 = vmul.f32 1.0, %v1632
        %v1634 = vrcp.pop %v1622
        %v1635 = vmul.f32 1.0, %v1634
        %v1636 = vrcp.pop %v1623
        %v1637 = vmul.f32 1.0, %v1636
        %v1638 = vrcp.pop %v1624
        %v1639 = vmul.f32 1.0, %v1638
        %v1640 = vrcp.pop %v1625
        %v1641 = vmul.f32 1.0, %v1640
        %1650 = vrot.lane.b32.xlu0 %v1556, 32
        %v1651 = vpop.permute.xlu0 %1650
        %1652 = vrot.lane.b32.xlu0 %v1561, 32
        %v1653 = vpop.permute.xlu0 %1652
        %1654 = vrot.lane.b32.xlu0 %v1566, 32
        %v1655 = vpop.permute.xlu0 %1654
        %1656 = vrot.lane.b32.xlu0 %v1571, 32
        %v1657 = vpop.permute.xlu0 %1656
        %1658 = vrot.lane.b32.xlu0 %v1576, 32
        %v1659 = vpop.permute.xlu0 %1658
        %1660 = vrot.lane.b32.xlu0 %v1581, 32
        %v1661 = vpop.permute.xlu0 %1660
        %1662 = vrot.lane.b32.xlu0 %v1586, 32
        %v1663 = vpop.permute.xlu0 %1662
        %1664 = vrot.lane.b32.xlu0 %v1591, 32
        %v1665 = vpop.permute.xlu0 %1664
        %v1674 = vmul.f32 %v1627, %v1651
        %v1675 = vmul.f32 %v1629, %v1653
        %v1676 = vmul.f32 %v1631, %v1655
        %v1677 = vmul.f32 %v1633, %v1657
        %v1678 = vmul.f32 %v1635, %v1659
        %v1679 = vmul.f32 %v1637, %v1661
        %v1680 = vmul.f32 %v1639, %v1663
        %v1681 = vmul.f32 %v1641, %v1665
        %1690 = vrot.lane.b32.xlu0 %v1674, 64
        %v1691 = vpop.permute.xlu0 %1690
        %1692 = vrot.lane.b32.xlu0 %v1675, 64
        %v1693 = vpop.permute.xlu0 %1692
        %1694 = vrot.lane.b32.xlu0 %v1676, 64
        %v1695 = vpop.permute.xlu0 %1694
        %1696 = vrot.lane.b32.xlu0 %v1677, 64
        %v1697 = vpop.permute.xlu0 %1696
        %1698 = vrot.lane.b32.xlu0 %v1678, 64
        %v1699 = vpop.permute.xlu0 %1698
        %1700 = vrot.lane.b32.xlu0 %v1679, 64
        %v1701 = vpop.permute.xlu0 %1700
        %1702 = vrot.lane.b32.xlu0 %v1680, 64
        %v1703 = vpop.permute.xlu0 %1702
        %1704 = vrot.lane.b32.xlu0 %v1681, 64
        %v1705 = vpop.permute.xlu0 %1704
        %v1714 = vadd.f32 %v1556, %v1691
        %v1715 = vadd.f32 %v1561, %v1693
        %v1716 = vadd.f32 %v1566, %v1695
        %v1717 = vadd.f32 %v1571, %v1697
        %v1718 = vadd.f32 %v1576, %v1699
        %v1719 = vadd.f32 %v1581, %v1701
        %v1720 = vadd.f32 %v1586, %v1703
        %v1721 = vadd.f32 %v1591, %v1705
        %v1722 = vtanh.pop %v1714
        %v1723 = vtanh.pop %v1715
        %v1724 = vtanh.pop %v1716
        %v1725 = vtanh.pop %v1717
        %v1726 = vtanh.pop %v1718
        %v1727 = vtanh.pop %v1719
        %v1728 = vtanh.pop %v1720
        %v1729 = vtanh.pop %v1721
        %v1730 = vsub.f32 %v1072, %v1722
        %v1731 = vsub.f32 %v1073, %v1723
        %v1732 = vsub.f32 %v1074, %v1724
        %v1733 = vsub.f32 %v1075, %v1725
        %v1734 = vsub.f32 %v1076, %v1726
        %v1735 = vsub.f32 %v1077, %v1727
        %v1736 = vsub.f32 %v1078, %v1728
        %v1737 = vsub.f32 %v1079, %v1729
        %1746 = vrot.lane.b32.xlu0 %v1730, 96
        %v1747 = vpop.permute.xlu0 %1746
        %1748 = vrot.lane.b32.xlu0 %v1731, 96
        %v1749 = vpop.permute.xlu0 %1748
        %1750 = vrot.lane.b32.xlu0 %v1732, 96
        %v1751 = vpop.permute.xlu0 %1750
        %1752 = vrot.lane.b32.xlu0 %v1733, 96
        %v1753 = vpop.permute.xlu0 %1752
        %1754 = vrot.lane.b32.xlu0 %v1734, 96
        %v1755 = vpop.permute.xlu0 %1754
        %1756 = vrot.lane.b32.xlu0 %v1735, 96
        %v1757 = vpop.permute.xlu0 %1756
        %1758 = vrot.lane.b32.xlu0 %v1736, 96
        %v1759 = vpop.permute.xlu0 %1758
        %1760 = vrot.lane.b32.xlu0 %v1737, 96
        %v1761 = vpop.permute.xlu0 %1760
        %v1770 = vmul.f32 %v1627, %v1747
        %v1771 = vmul.f32 %v1629, %v1749
        %v1772 = vmul.f32 %v1631, %v1751
        %v1773 = vmul.f32 %v1633, %v1753
        %v1774 = vmul.f32 %v1635, %v1755
        %v1775 = vmul.f32 %v1637, %v1757
        %v1776 = vmul.f32 %v1639, %v1759
        %v1777 = vmul.f32 %v1641, %v1761
        %1786 = vrot.lane.b32.xlu0 %v1770, 32
        %v1787 = vpop.permute.xlu0 %1786
        %1788 = vrot.lane.b32.xlu0 %v1771, 32
        %v1789 = vpop.permute.xlu0 %1788
        %1790 = vrot.lane.b32.xlu0 %v1772, 32
        %v1791 = vpop.permute.xlu0 %1790
        %1792 = vrot.lane.b32.xlu0 %v1773, 32
        %v1793 = vpop.permute.xlu0 %1792
        %1794 = vrot.lane.b32.xlu0 %v1774, 32
        %v1795 = vpop.permute.xlu0 %1794
        %1796 = vrot.lane.b32.xlu0 %v1775, 32
        %v1797 = vpop.permute.xlu0 %1796
        %1798 = vrot.lane.b32.xlu0 %v1776, 32
        %v1799 = vpop.permute.xlu0 %1798
        %1800 = vrot.lane.b32.xlu0 %v1777, 32
        %v1801 = vpop.permute.xlu0 %1800
        %v1810 = vadd.f32 %v1722, %v1787
        %v1811 = vadd.f32 %v1723, %v1789
        %v1812 = vadd.f32 %v1724, %v1791
        %v1813 = vadd.f32 %v1725, %v1793
        %v1814 = vadd.f32 %v1726, %v1795
        %v1815 = vadd.f32 %v1727, %v1797
        %v1816 = vadd.f32 %v1728, %v1799
        %v1817 = vadd.f32 %v1729, %v1801
        %1820 = vrot.lane.b32.xlu0 %v1810, 64
        %v1821 = vpop.permute.xlu0 %1820
        %1822 = vrot.lane.b32.xlu0 %v1811, 64
        %v1823 = vpop.permute.xlu0 %1822
        %1828 = vrot.lane.b32.xlu0 %v1812, 96
        %v1829 = vpop.permute.xlu0 %1828
        %1830 = vrot.lane.b32.xlu0 %v1813, 96
        %v1831 = vpop.permute.xlu0 %1830
        %1836 = vrot.lane.b32.xlu0 %v1816, 32
        %v1837 = vpop.permute.xlu0 %1836
        %1838 = vrot.lane.b32.xlu0 %v1817, 32
        %v1839 = vpop.permute.xlu0 %1838
        %v1842 = vsel %vm331, %v1821, %v1829
        %v1843 = vsel %vm331, %v1823, %v1831
        %v1844 = vsel %vm694, %v1842, %v1814
        %v1845 = vsel %vm694, %v1843, %v1815
        %vm1846 = vcmask 785408
        %v1847 = vsel %vm1846, %v1844, %v1837
        %v1848 = vsel %vm1846, %v1845, %v1839
        %1849 = vst [vmem:[%s297] sm:$0xff] %v1847
        %1850 = vst [vmem:[%s297 + $0x8] sm:$0xff] %v1848
        %s1851 = sand.u32 %s153, 1
        %s1852 = scalar_lea.sflag [#allocation4], %s1851
        %s1853 = sand.u32 %s153, 1
        %s1854 = smul.addr %s1853, 16
        %s1855 = scalar_lea.vmem [#allocation7], %s1854
        // Predicated region
        $region49: #{tpu_custom_call.1} parent=39 // pred_check
          %p1856 = pneg %p163
        $region50: #{tpu_custom_call.1} parent=39 // pred_check_branch
          %1858 = sbr.rel (%p1856) target = $region52
        $region51: #{tpu_custom_call.1} parent=39 // pred_region
          %s1860 = ssub.s32 256, 256
          %1861 = vsyncadd %s1852, %s1860
          %s1862 = smul.addr %s25, 2
          %s1863 = smul.addr %s1862, 128
          %s1864 = scalar_lea.hbm %s5, %s1863
          %s1865 = sshll.u32 %s1855, 4
          %s1866 = int_to_ptr.vmem [resolvable:$true] %s1865
          %1871 = dma.vmem_to_hbm [thread:$0]  %s1866, 256, %s1864, %s1852, 128, 128, 8
        $region52: #{tpu_custom_call.1} parent=39 // pred_fallthru
          _
      $region40: #{tpu_custom_call.1} parent=5 // pred_fallthru
        _
      %p1872 = scmp.le.s32.totalorder 2, %s20
      // Predicated region
      $region53: #{tpu_custom_call.1} parent=5 // pred_check
        %p1873 = pneg %p1872
      $region54: #{tpu_custom_call.1} parent=5 // pred_check_branch
        %1875 = sbr.rel (%p1873) target = $region56
      $region55: #{tpu_custom_call.1} parent=5 // pred_region
        %s1876 = ssub.s32 %s20, 2
        // Predicated region
        $region57: #{tpu_custom_call.1} parent=55 // pred_check
          %p1877 = pneg %p169
        $region58: #{tpu_custom_call.1} parent=55 // pred_check_branch
          %1879 = sbr.rel (%p1877) target = $region60
        $region59: #{tpu_custom_call.1} parent=55 // pred_region
          %s1880 = sand.u32 %s154, 1
          %s1881 = scalar_lea.sflag [#allocation4], %s1880
          %s1882 = sand.u32 %s154, 1
          %s1883 = smul.addr %s1882, 16
          %s1884 = scalar_lea.vmem [#allocation7], %s1883
          %1885 = dma.done %s1881, 256
        $region60: #{tpu_custom_call.1} parent=55 // pred_fallthru
          _
      $region56: #{tpu_custom_call.1} parent=5 // pred_fallthru
        _
    $region6: #{tpu_custom_call.1} parent=1 // loop_footer
      %s24 = sadd.s32 1, %s20
    $region7: #{tpu_custom_call.1} parent=1 // loop_footer_branch
      %19 = sbr.rel target = $region3
    $region8: #{tpu_custom_call.1} parent=1 // loop_exit
      _
    %1886 = vsyncpa [#allocation3], 1
    %s1887 = scalar_lea.sflag [#allocation3], 1
    %1888 = vsyncpa %s1887, 1
    %1889 = vsyncpa [#allocation6], 1
    %s1890 = scalar_lea.sflag [#allocation6], 1
    %1891 = vsyncpa %s1890, 1
    %1892 = vsyncpa [#allocation4], 1
    %s1893 = scalar_lea.sflag [#allocation4], 1
    %1894 = vsyncpa %s1893, 1

</llo_original>
